<compile_context>
chip_gen: v5e
topology: v5e:2x2
jax: 0.10.0
libtpu: 0.0.40
codegen_flags: <defaults>
</compile_context>

<pallas_src>
import jax
import jax.numpy as jnp
from jax.experimental import pallas as pl
from jax.experimental.pallas import tpu as pltpu


def _round_up(x, m):
    return ((x + m - 1) // m) * m


def _incidence_tile(f_tile, v0, tile_v):
    """Build the (tile_f, tile_v) incidence tile M^T[f, v] = #{k: faces[f,k]==v0+v}.

    f_tile: (tile_f, 3) int32 face->vertex ids (padding sentinel -1).
    Returns bf16 counts in {0,1,2,3} (exact in bf16).
    """
    tile_f = f_tile.shape[0]
    # Shift the tiny (tile_f, 3) tensor instead of the full-tile iota.
    f_shift = f_tile - v0                                               # (tile_f, 3)
    vids = jax.lax.broadcasted_iota(jnp.int32, (tile_f, tile_v), 1)     # (tile_f, tile_v)
    cnt = ((f_shift[:, 0:1] == vids).astype(jnp.int32)
           + (f_shift[:, 1:2] == vids)
           + (f_shift[:, 2:3] == vids))                                 # int32 counts
    return cnt.astype(jnp.bfloat16)


def _unpool_kernel_1step(rates_ref, faces_ref, x_ref, vs_ref, out_ref):
    """Grid = (B, V/tile_v); whole F reduction in a single step (no scratch).

    rates_ref : SMEM (B,)           f32   per-mesh update rate
    faces_ref : VMEM (tile_f, 3)    i32   face -> vertex ids
    x_ref     : VMEM (3, tile_f)    bf16  per-face 3-d displacement features
    vs_ref    : VMEM (3, tile_v)    f32   current vertex positions (transposed)
    out_ref   : VMEM (3, tile_v)    f32   updated vertex positions (transposed)
    """
    b = pl.program_id(0)
    vi = pl.program_id(1)
    tile_v = out_ref.shape[1]

    m = _incidence_tile(faces_ref[...], vi * tile_v, tile_v)            # (tile_f, tile_v) bf16
    upd = jnp.dot(x_ref[...], m, preferred_element_type=jnp.float32)    # (3, tile_v) f32
    out_ref[...] = vs_ref[...] + rates_ref[b] * upd


def _unpool_kernel_multi(rates_ref, faces_ref, x_ref, vs_ref, out_ref, acc_ref):
    """Grid = (B, V/tile_v, F/tile_f); F reduction accumulated in f32 scratch."""
    b = pl.program_id(0)
    vi = pl.program_id(1)
    kf = pl.program_id(2)
    tile_v = acc_ref.shape[1]

    @pl.when(kf == 0)
    def _():
        acc_ref[...] = jnp.zeros_like(acc_ref)

    m = _incidence_tile(faces_ref[...], vi * tile_v, tile_v)            # (tile_f, tile_v) bf16
    acc_ref[...] += jnp.dot(x_ref[...], m, preferred_element_type=jnp.float32)

    @pl.when(kf == pl.num_programs(2) - 1)
    def _():
        out_ref[...] = vs_ref[...] + rates_ref[b] * acc_ref[...]


def mesh_unpool_optimisor(features, vs, faces, rates, *, tile_v=1024, tile_f=1024):
    """features: (B, 3, F) (native NCW), vs: (B, V, 3) f32,
    faces: (B, F, 3) i32 with entries in [0, V), rates: (B,) f32."""
    B, C, F = features.shape
    V = vs.shape[1]
    assert C == 3 and vs.shape == (B, V, 3) and faces.shape == (B, F, 3)

    # 256-aligned tiles (v6e MXU is 256x256); clamp to the padded problem size
    # so a small mesh collapses to a single tile per axis.
    Vp_min = _round_up(V, 256)
    Fp_min = _round_up(F, 256)
    tile_v = min(_round_up(tile_v, 256), Vp_min)
    tile_f = min(_round_up(tile_f, 256), Fp_min)
    # v7x megacore: with B == 1 make sure the vertex axis yields >= 2 parallel groups.
    if B == 1 and Vp_min // tile_v < 2 and Vp_min >= 512:
        tile_v = _round_up(Vp_min // 2, 256)
    Vp = _round_up(V, tile_v)
    Fp = _round_up(F, tile_f)
    n_vi = Vp // tile_v
    n_kf = Fp // tile_f

    # bf16 features: half HBM traffic, single-pass MXU weight streaming; the
    # accumulation stays f32 via preferred_element_type.
    x = features.astype(jnp.bfloat16)                                   # (B, 3, F)
    f_i = faces.astype(jnp.int32)
    if Fp != F:
        x = jnp.pad(x, ((0, 0), (0, 0), (0, Fp - F)))
        f_i = jnp.pad(f_i, ((0, 0), (0, Fp - F), (0, 0)), constant_values=-1)
    vs_t = jnp.transpose(vs, (0, 2, 1)).astype(jnp.float32)             # (B, 3, V) lane-dense
    if Vp != V:
        vs_t = jnp.pad(vs_t, ((0, 0), (0, 0), (0, Vp - V)))
    rates_f = rates.astype(jnp.float32)

    out_shape = jax.ShapeDtypeStruct((B, 3, Vp), jnp.float32)
    vmem_limit = 32 * 1024 * 1024   # safe on v5e/v6e (128 MiB) and v7x (64 MiB)

    if n_kf == 1:
        # Reduction axis collapsed: no scratch accumulator, no init/finalize.
        out_t = pl.pallas_call(
            _unpool_kernel_1step,
            out_shape=out_shape,
            grid=(B, n_vi),
            in_specs=[
                pl.BlockSpec(memory_space=pltpu.MemorySpace.SMEM),                  # rates
                pl.BlockSpec((None, tile_f, 3), lambda b, vi: (b, 0, 0)),           # faces
                pl.BlockSpec((None, 3, tile_f), lambda b, vi: (b, 0, 0)),           # features
                pl.BlockSpec((None, 3, tile_v), lambda b, vi: (b, 0, vi)),          # vs
            ],
            out_specs=pl.BlockSpec((None, 3, tile_v), lambda b, vi: (b, 0, vi)),
            compiler_params=pltpu.CompilerParams(
                dimension_semantics=("parallel", "parallel"),
                vmem_limit_bytes=vmem_limit),
        )(rates_f, f_i, x, vs_t)
    else:
        out_t = pl.pallas_call(
            _unpool_kernel_multi,
            out_shape=out_shape,
            grid=(B, n_vi, n_kf),
            in_specs=[
                pl.BlockSpec(memory_space=pltpu.MemorySpace.SMEM),                  # rates
                pl.BlockSpec((None, tile_f, 3), lambda b, vi, kf: (b, kf, 0)),      # faces
                pl.BlockSpec((None, 3, tile_f), lambda b, vi, kf: (b, 0, kf)),      # features
                pl.BlockSpec((None, 3, tile_v), lambda b, vi, kf: (b, 0, vi)),      # vs
            ],
            out_specs=pl.BlockSpec((None, 3, tile_v), lambda b, vi, kf: (b, 0, vi)),
            scratch_shapes=[pltpu.VMEM((3, tile_v), jnp.float32)],
            compiler_params=pltpu.CompilerParams(
                dimension_semantics=("parallel", "parallel", "arbitrary"),
                vmem_limit_bytes=vmem_limit),
        )(rates_f, f_i, x, vs_t)

    return jnp.transpose(out_t[:, :, :V], (0, 2, 1))                    # back to (B, V, 3)


def _reference(features, vs, faces, rates):
    """Pure-JAX reference matching the PyTorch double loop (scatter-add)."""
    x = jnp.transpose(features, (0, 2, 1))
    outs = []
    for i in range(features.shape[0]):
        _sum = jnp.zeros_like(vs[i])
        for k in range(3):
            _sum = _sum.at[faces[i, :, k]].add(x[i])
        outs.append(vs[i] + rates[i] * _sum)
    return jnp.stack(outs)


if __name__ == "__main__":
    key = jax.random.PRNGKey(0)
    B, V, F = 2, 256, 384

    k_feat, k_vs, k_faces = jax.random.split(key, 3)
    features = jax.random.normal(k_feat, (B, 3, F), dtype=jnp.float32)   # NCW (like PyTorch)
    vs = jax.random.normal(k_vs, (B, V, 3), dtype=jnp.float32)
    faces = jax.random.randint(k_faces, (B, F, 3), 0, V, dtype=jnp.int32)
    rates = jnp.array([0.05, 0.08], dtype=jnp.float32)                   # mesh.min_edge_length

    # Default (large-tile, single reduction step) path.
    out = mesh_unpool_optimisor(features, vs, faces, rates)
    out = jax.block_until_ready(out)
    assert out.shape == (B, V, 3)

    # Also exercise the multi-step (accumulating) kernel with smaller tiles.
    out_multi = mesh_unpool_optimisor(features, vs, faces, rates, tile_v=256, tile_f=256)
    out_multi = jax.block_until_ready(out_multi)

    # Tight check against a reference using bf16-quantized features (the kernel's
    # only lossy step is the bf16 cast of x; accumulation is f32).
    features_q = features.astype(jnp.bfloat16).astype(jnp.float32)
    ref_q = _reference(features_q, vs, faces, rates)
    assert jnp.allclose(out, ref_q, atol=1e-3, rtol=1e-3), "mismatch vs bf16-x reference"
    assert jnp.allclose(out_multi, ref_q, atol=1e-3, rtol=1e-3), "multi-step mismatch"

    # Loose sanity check against the full-f32 reference (bounds bf16 quantization).
    ref = _reference(features, vs, faces, rates)
    assert jnp.allclose(out, ref, atol=5e-2, rtol=5e-2), "mismatch vs f32 reference"

    print("KERNEL_OK")
</pallas_src>

<mosaic_0001>
module attributes {stable_mosaic.version = 11 : i64} {
  func.func @_unpool_kernel_1step(%arg0: i32, %arg1: i32, %arg2: memref<2xf32, #tpu.memory_space<smem>>, %arg3: memref<1x512x3xi32, #tpu.memory_space<vmem>>, %arg4: memref<1x3x512xbf16, #tpu.memory_space<vmem>>, %arg5: memref<1x3x256xf32, #tpu.memory_space<vmem>>, %arg6: memref<1x3x256xf32, #tpu.memory_space<vmem>>) attributes {dimension_semantics = [#tpu.dimension_semantics<parallel>, #tpu.dimension_semantics<parallel>], iteration_bounds = array<i64: 2, 1>, scalar_prefetch = 0 : i64, scratch_operands = 0 : i64, tpu.core_type = #tpu.core_type<tc>, window_params = [{transform_indices = @transform_0, window_bounds = array<i64: 2>}, {transform_indices = @transform_1, window_bounds = array<i64: 1, 512, 3>}, {transform_indices = @transform_2, window_bounds = array<i64: 1, 3, 512>}, {transform_indices = @transform_3, window_bounds = array<i64: 1, 3, 256>}, {transform_indices = @transform_4, window_bounds = array<i64: 1, 3, 256>}]} {
    %c0 = arith.constant 0 : index
    %c0_0 = arith.constant 0 : index
    %c0_1 = arith.constant 0 : index
    %0 = vector.load %arg3[%c0, %c0_0, %c0_1] : memref<1x512x3xi32, #tpu.memory_space<vmem>>, vector<1x512x3xi32>
    %1 = vector.shape_cast %0 : vector<1x512x3xi32> to vector<512x3xi32>
    %c256_i32 = arith.constant 256 : i32
    %2 = arith.muli %arg1, %c256_i32 : i32
    %3 = vector.broadcast %2 : i32 to vector<512x3xi32>
    %4 = arith.subi %1, %3 : vector<512x3xi32>
    %5 = tpu.iota {dimensions = array<i32: 1>} : vector<512x256xi32>
    %6 = vector.extract_strided_slice %4 {offsets = [0, 0], sizes = [512, 1], strides = [1, 1]} : vector<512x3xi32> to vector<512x1xi32>
    %7 = vector.broadcast %6 : vector<512x1xi32> to vector<512x256xi32>
    %8 = arith.cmpi eq, %7, %5 : vector<512x256xi32>
    %9 = arith.extui %8 : vector<512x256xi1> to vector<512x256xi32>
    %10 = vector.extract_strided_slice %4 {offsets = [0, 1], sizes = [512, 1], strides = [1, 1]} : vector<512x3xi32> to vector<512x1xi32>
    %11 = vector.broadcast %10 : vector<512x1xi32> to vector<512x256xi32>
    %12 = arith.cmpi eq, %11, %5 : vector<512x256xi32>
    %13 = arith.extui %12 : vector<512x256xi1> to vector<512x256xi32>
    %14 = arith.addi %9, %13 : vector<512x256xi32>
    %15 = vector.extract_strided_slice %4 {offsets = [0, 2], sizes = [512, 1], strides = [1, 1]} : vector<512x3xi32> to vector<512x1xi32>
    %16 = vector.broadcast %15 : vector<512x1xi32> to vector<512x256xi32>
    %17 = arith.cmpi eq, %16, %5 : vector<512x256xi32>
    %18 = arith.extui %17 : vector<512x256xi1> to vector<512x256xi32>
    %19 = arith.addi %14, %18 : vector<512x256xi32>
    %20 = arith.sitofp %19 : vector<512x256xi32> to vector<512x256xbf16>
    %c0_2 = arith.constant 0 : index
    %c0_3 = arith.constant 0 : index
    %c0_4 = arith.constant 0 : index
    %21 = vector.load %arg4[%c0_2, %c0_3, %c0_4] : memref<1x3x512xbf16, #tpu.memory_space<vmem>>, vector<1x3x512xbf16>
    %22 = vector.shape_cast %21 : vector<1x3x512xbf16> to vector<3x512xbf16>
    %cst = arith.constant dense<0.000000e+00> : vector<3x256xf32>
    %23 = tpu.matmul %22, %20, %cst {dimension_numbers = #tpu.dot_dimension_numbers<[1], [0], [0], [1], [0, 0, 1, 1], [], []>} : vector<3x512xbf16>, vector<512x256xbf16>, vector<3x256xf32> -> vector<3x256xf32>
    %c0_5 = arith.constant 0 : index
    %c0_6 = arith.constant 0 : index
    %c0_7 = arith.constant 0 : index
    %24 = vector.load %arg5[%c0_5, %c0_6, %c0_7] : memref<1x3x256xf32, #tpu.memory_space<vmem>>, vector<1x3x256xf32>
    %25 = vector.shape_cast %24 : vector<1x3x256xf32> to vector<3x256xf32>
    %26 = arith.index_cast %arg0 : i32 to index
    %27 = memref.load %arg2[%26] : memref<2xf32, #tpu.memory_space<smem>>
    %28 = vector.broadcast %27 : f32 to vector<3x256xf32>
    %29 = arith.mulf %28, %23 : vector<3x256xf32>
    %30 = arith.addf %25, %29 : vector<3x256xf32>
    %c0_8 = arith.constant 0 : index
    %c0_9 = arith.constant 0 : index
    %c0_10 = arith.constant 0 : index
    %31 = vector.load %arg6[%c0_8, %c0_9, %c0_10] : memref<1x3x256xf32, #tpu.memory_space<vmem>>, vector<1x3x256xf32>
    %32 = vector.shape_cast %31 : vector<1x3x256xf32> to vector<3x256xf32>
    %33 = vector.shape_cast %30 : vector<3x256xf32> to vector<1x3x256xf32>
    tpu.vector_store %arg6[%c0_8, %c0_9, %c0_10], %33 {strides = array<i32>} : memref<1x3x256xf32, #tpu.memory_space<vmem>>, vector<1x3x256xf32>,
    return
  }
  func.func @transform_0(%arg0: i32, %arg1: i32) -> i32 {
    %c0_i32 = arith.constant 0 : i32
    %c0_i32_0 = arith.constant 0 : i32
    return %c0_i32 : i32
  }
  func.func @transform_1(%arg0: i32, %arg1: i32) -> (i32, i32, i32) {
    %c0_i32 = arith.constant 0 : i32
    %c0_i32_0 = arith.constant 0 : i32
    %c0_i32_1 = arith.constant 0 : i32
    return %arg0, %c0_i32, %c0_i32_0 : i32, i32, i32
  }
  func.func @transform_2(%arg0: i32, %arg1: i32) -> (i32, i32, i32) {
    %c0_i32 = arith.constant 0 : i32
    %c0_i32_0 = arith.constant 0 : i32
    %c0_i32_1 = arith.constant 0 : i32
    return %arg0, %c0_i32, %c0_i32_0 : i32, i32, i32
  }
  func.func @transform_3(%arg0: i32, %arg1: i32) -> (i32, i32, i32) {
    %c0_i32 = arith.constant 0 : i32
    %c0_i32_0 = arith.constant 0 : i32
    return %arg0, %c0_i32, %arg1 : i32, i32, i32
  }
  func.func @transform_4(%arg0: i32, %arg1: i32) -> (i32, i32, i32) {
    %c0_i32 = arith.constant 0 : i32
    %c0_i32_0 = arith.constant 0 : i32
    return %arg0, %c0_i32, %arg1 : i32, i32, i32
  }
}

</mosaic_0001>

<llo_original>
// kernel: tpu_custom_call.1
$region0: #{tpu_custom_call.1}
  #allocation0 [shape = 'u32[]', space=smem, size = 0x4, offset = 0x4, fixed_abs, tag = 'smem constant byte address 0x4 - core index']
  #allocation1 [shape = 'u32[72,128]{1,0:T(1,128)}', space=vmem, size = 0x9000, scoped, tag = 'internal scratch']
  %s0 = inlined_call_operand.vmem [shape: f32[2], index: 0, kind: input, shape index: {}]
  %s1 = inlined_call_operand.vmem [shape: s32[2,512,3], index: 1, kind: input, shape index: {}]
  %s2 = inlined_call_operand.vmem [shape: bf16[2,3,512], index: 2, kind: input, shape index: {}]
  %s3 = inlined_call_operand.vmem [shape: f32[2,3,256], index: 3, kind: input, shape index: {}]
  %s4 = inlined_call_operand.vmem [shape: f32[2,3,256], index: 4, kind: output, shape index: {}]
  %s5 = sld [smem:[#allocation0]]
  $region53: #{tpu_custom_call.1} parent=0
    _
  %s7 = ssub.s32 1, %s5
  %s8 = scalar_select 0, %s7, %s5
  $region1: #{tpu_custom_call.1} parent=0
    #allocation2 [shape = 'u8[512]{0}', space=smem, size = 0x200, scoped, tag = 'input window, operand 0, single buffered']
    #allocation3 [shape = 's32[2]{0}', space=sflag, size = 0x8, scoped, tag = 'scoped memory for tpu_custom_call.1']
    %9 = vsyncpa [#allocation3], 0
    loop: start=0, step=1, limit=4
    $region2: #{tpu_custom_call.1} parent=1 // loop_pre_header
      _
    $region3: #{tpu_custom_call.1} parent=1 // loop_header
      %s11 = sphi 0, %s15
      %p12 = scmp.ge.s32.totalorder %s11, 4
      %s18 = sphi 0, %s30
      %s19 = sphi 0, %s26
      %s20 = sphi 0, %s18
      %s21 = sphi 0, %s19
      %s22 = sphi 0, %s20
      %s23 = sphi 0, %s21
      %s31 = sphi 0, %s31
      %s33 = sphi 0, %s31
      %s34 = sphi 0, %s33
      %s48 = sphi 0, %s34
      %s54 = sphi 0, %s56
      %s57 = sphi 0, %s54
      %s58 = sphi 0, %s57
      %s74 = sphi 0, %s58
      %s80 = sphi 0, %s82
      %s83 = sphi 0, %s80
      %s84 = sphi 0, %s83
      %s100 = sphi 0, %s84
      %s108 = sphi 0, %s110
      %s111 = sphi 0, %s108
      %s112 = sphi 0, %s111
      %s128 = sphi 0, %s112
      %s136 = sphi 0, %s138
      %s139 = sphi 0, %s136
      %s140 = sphi 0, %s139
      %s156 = sphi 0, %s140
    $region4: #{tpu_custom_call.1} parent=1 // loop_header_branch
      %14 = sbr.rel (%p12) target = $region8
    $region5: #{tpu_custom_call.1} parent=1 // loop_body
      %s16 = ssub.s32 %s11, 1
      %s17 = ssub.s32 %s11, 2
      %s24 = sadd.s32 1, %s19
      %p25 = scmp.ge.s32.totalorder %s24, 1
      %s26 = scalar_select %p25, 0, %s24
      %s27 = sadd.s32 1, %s18
      %s28 = scalar_select %p25, %s27, %s18
      %p29 = scmp.ge.s32.totalorder %s28, 2
      %s30 = scalar_select %p29, 0, %s28
      %s32 = sadd.s32 %s31, 1
      %p35 = scmp.eq.s32.totalorder %s11, 1
      %p36 = scmp.ne.s32.totalorder %s31, %s33
      %p37 = scmp.eq.s32.totalorder %s11, 0
      %p38 = por %p36, %p37
      %p39 = scmp.ne.s32.totalorder %s31, %s33
      %p40 = scmp.eq.s32.totalorder %s16, 1
      %p41 = por %p39, %p40
      %p42 = scmp.ne.s32.totalorder %s33, %s34
      %p43 = scmp.eq.s32.totalorder %s16, 0
      %p44 = por %p42, %p43
      %p45 = scmp.ne.s32.totalorder %s33, %s34
      %p46 = scmp.eq.s32.totalorder %s17, 1
      %p47 = por %p45, %p46
      %p49 = scmp.ne.s32.totalorder %s34, %s48
      %p50 = scmp.eq.s32.totalorder %s17, 0
      %p51 = por %p49, %p50
      %s52 = ssub.s32 %s18, %s30
      %p53 = scmp.eq.s32.totalorder %s52, 0
      %s55 = sadd.s32 %s54, 1
      %s56 = scalar_select %p53, %s54, %s55
      %p59 = pneg %p53
      %p60 = scmp.eq.s32.totalorder %s11, 1
      %p61 = por %p59, %p60
      %p62 = scmp.ne.s32.totalorder %s54, %s57
      %p63 = scmp.eq.s32.totalorder %s11, 0
      %p64 = por %p62, %p63
      %p65 = scmp.ne.s32.totalorder %s54, %s57
      %p66 = scmp.eq.s32.totalorder %s16, 1
      %p67 = por %p65, %p66
      %p68 = scmp.ne.s32.totalorder %s57, %s58
      %p69 = scmp.eq.s32.totalorder %s16, 0
      %p70 = por %p68, %p69
      %p71 = scmp.ne.s32.totalorder %s57, %s58
      %p72 = scmp.eq.s32.totalorder %s17, 1
      %p73 = por %p71, %p72
      %p75 = scmp.ne.s32.totalorder %s58, %s74
      %p76 = scmp.eq.s32.totalorder %s17, 0
      %p77 = por %p75, %p76
      %s78 = ssub.s32 %s18, %s30
      %p79 = scmp.eq.s32.totalorder %s78, 0
      %s81 = sadd.s32 %s80, 1
      %s82 = scalar_select %p79, %s80, %s81
      %p85 = pneg %p79
      %p86 = scmp.eq.s32.totalorder %s11, 1
      %p87 = por %p85, %p86
      %p88 = scmp.ne.s32.totalorder %s80, %s83
      %p89 = scmp.eq.s32.totalorder %s11, 0
      %p90 = por %p88, %p89
      %p91 = scmp.ne.s32.totalorder %s80, %s83
      %p92 = scmp.eq.s32.totalorder %s16, 1
      %p93 = por %p91, %p92
      %p94 = scmp.ne.s32.totalorder %s83, %s84
      %p95 = scmp.eq.s32.totalorder %s16, 0
      %p96 = por %p94, %p95
      %p97 = scmp.ne.s32.totalorder %s83, %s84
      %p98 = scmp.eq.s32.totalorder %s17, 1
      %p99 = por %p97, %p98
      %p101 = scmp.ne.s32.totalorder %s84, %s100
      %p102 = scmp.eq.s32.totalorder %s17, 0
      %p103 = por %p101, %p102
      %s104 = ssub.s32 %s18, %s30
      %s105 = ssub.s32 %s19, %s26
      %s106 = sor.u32 %s104, %s105
      %p107 = scmp.eq.s32.totalorder %s106, 0
      %s109 = sadd.s32 %s108, 1
      %s110 = scalar_select %p107, %s108, %s109
      %p113 = pneg %p107
      %p114 = scmp.eq.s32.totalorder %s11, 1
      %p115 = por %p113, %p114
      %p116 = scmp.ne.s32.totalorder %s108, %s111
      %p117 = scmp.eq.s32.totalorder %s11, 0
      %p118 = por %p116, %p117
      %p119 = scmp.ne.s32.totalorder %s108, %s111
      %p120 = scmp.eq.s32.totalorder %s16, 1
      %p121 = por %p119, %p120
      %p122 = scmp.ne.s32.totalorder %s111, %s112
      %p123 = scmp.eq.s32.totalorder %s16, 0
      %p124 = por %p122, %p123
      %p125 = scmp.ne.s32.totalorder %s111, %s112
      %p126 = scmp.eq.s32.totalorder %s17, 1
      %p127 = por %p125, %p126
      %p129 = scmp.ne.s32.totalorder %s112, %s128
      %p130 = scmp.eq.s32.totalorder %s17, 0
      %p131 = por %p129, %p130
      %s132 = ssub.s32 %s18, %s30
      %s133 = ssub.s32 %s19, %s26
      %s134 = sor.u32 %s132, %s133
      %p135 = scmp.eq.s32.totalorder %s134, 0
      %s137 = sadd.s32 %s136, 1
      %s138 = scalar_select %p135, %s136, %s137
      %p141 = pneg %p135
      %p142 = scmp.eq.s32.totalorder %s11, 1
      %p143 = por %p141, %p142
      %p144 = scmp.ne.s32.totalorder %s136, %s139
      %p145 = scmp.eq.s32.totalorder %s11, 0
      %p146 = por %p144, %p145
      %p147 = scmp.ne.s32.totalorder %s136, %s139
      %p148 = scmp.eq.s32.totalorder %s16, 1
      %p149 = por %p147, %p148
      %p150 = scmp.ne.s32.totalorder %s139, %s140
      %p151 = scmp.eq.s32.totalorder %s16, 0
      %p152 = por %p150, %p151
      %p153 = scmp.ne.s32.totalorder %s139, %s140
      %p154 = scmp.eq.s32.totalorder %s17, 1
      %p155 = por %p153, %p154
      %p157 = scmp.ne.s32.totalorder %s140, %s156
      %p158 = scmp.eq.s32.totalorder %s17, 0
      %p159 = por %p157, %p158
      %p160 = scmp.le.s32.totalorder 1, %s11
      %p161 = scmp.lt.s32.totalorder %s11, 3
      %p162 = pnand %p160, %p161
      %p163 = pneg %p162
      // Predicated region
      $region9: #{tpu_custom_call.1} parent=5 // pred_check
        _
      $region10: #{tpu_custom_call.1} parent=5 // pred_check_branch
        %165 = sbr.rel (%p162) target = $region12
      $region11: #{tpu_custom_call.1} parent=5 // pred_region
        %s166 = ssub.s32 %s11, 1
        // Predicated region
        $region13: #{tpu_custom_call.1} parent=11 // pred_check
          %p167 = pneg %p44
        $region14: #{tpu_custom_call.1} parent=11 // pred_check_branch
          %169 = sbr.rel (%p167) target = $region16
        $region15: #{tpu_custom_call.1} parent=11 // pred_region
          %171 = vsyncadd [#allocation3], 0
          %s173 = sshll.u32 %s0, 4
          %s174 = int_to_ptr.vmem [resolvable:$true] %s173
          %176 = dma.vmem_to_smem %s174, 16, [#allocation2], [#allocation3]
        $region16: #{tpu_custom_call.1} parent=11 // pred_fallthru
          _
      $region12: #{tpu_custom_call.1} parent=5 // pred_fallthru
        _
      %p177 = scmp.lt.s32.totalorder %s11, 2
      // Predicated region
      $region17: #{tpu_custom_call.1} parent=5 // pred_check
        %p178 = pneg %p177
      $region18: #{tpu_custom_call.1} parent=5 // pred_check_branch
        %180 = sbr.rel (%p178) target = $region20
      $region19: #{tpu_custom_call.1} parent=5 // pred_region
        // Predicated region
        $region21: #{tpu_custom_call.1} parent=19 // pred_check
          %p181 = pneg %p64
        $region22: #{tpu_custom_call.1} parent=19 // pred_check_branch
          %183 = sbr.rel (%p181) target = $region24
        $region23: #{tpu_custom_call.1} parent=19 // pred_region
          %p184 = scmp.lt.s32.totalorder %s18, 1
          %s185 = scalar_select %p184, %s18, 1
          %s186 = smul.addr %s185, 64
          %s187 = smul.addr %s186, 8
          %s188 = scalar_lea.vmem %s1, %s187
        $region24: #{tpu_custom_call.1} parent=19 // pred_fallthru
          _
        // Predicated region
        $region25: #{tpu_custom_call.1} parent=19 // pred_check
          %p189 = pneg %p90
        $region26: #{tpu_custom_call.1} parent=19 // pred_check_branch
          %191 = sbr.rel (%p189) target = $region28
        $region27: #{tpu_custom_call.1} parent=19 // pred_region
          %p192 = scmp.lt.s32.totalorder %s18, 1
          %s193 = scalar_select %p192, %s18, 1
          %s194 = smul.addr %s193, 4
          %s195 = smul.addr %s194, 2
          %s196 = scalar_lea.vmem %s2, %s195
        $region28: #{tpu_custom_call.1} parent=19 // pred_fallthru
          _
        // Predicated region
        $region29: #{tpu_custom_call.1} parent=19 // pred_check
          %p197 = pneg %p118
        $region30: #{tpu_custom_call.1} parent=19 // pred_check_branch
          %199 = sbr.rel (%p197) target = $region32
        $region31: #{tpu_custom_call.1} parent=19 // pred_region
          %s200 = smul.u32 2, %s19
          %p201 = scmp.lt.s32.totalorder %s18, 1
          %s202 = scalar_select %p201, %s18, 1
          %p203 = scmp.lt.s32.totalorder %s200, 1
          %s204 = scalar_select %p203, %s200, 1
          %s205 = smul.addr %s202, 2
          %s206 = sadd.s32 %s204, %s205
          %s207 = smul.addr %s206, 4
          %s208 = scalar_lea.vmem %s3, %s207
          %s209 = smul.u32 2, %s19
        $region32: #{tpu_custom_call.1} parent=19 // pred_fallthru
          _
      $region20: #{tpu_custom_call.1} parent=5 // pred_fallthru
        _
      %p210 = scmp.le.s32.totalorder 1, %s11
      %p211 = scmp.lt.s32.totalorder %s11, 3
      %p212 = pnand %p210, %p211
      %p213 = pneg %p212
      // Predicated region
      $region33: #{tpu_custom_call.1} parent=5 // pred_check
        _
      $region34: #{tpu_custom_call.1} parent=5 // pred_check_branch
        %215 = sbr.rel (%p212) target = $region36
      $region35: #{tpu_custom_call.1} parent=5 // pred_region
        %s216 = ssub.s32 %s11, 1
        // Predicated region
        $region37: #{tpu_custom_call.1} parent=35 // pred_check
          %p217 = pneg %p44
        $region38: #{tpu_custom_call.1} parent=35 // pred_check_branch
          %219 = sbr.rel (%p217) target = $region40
        $region39: #{tpu_custom_call.1} parent=35 // pred_region
          %221 = dma.done [#allocation3], 16
        $region40: #{tpu_custom_call.1} parent=35 // pred_fallthru
          _
        %222 = sfence
        %p223 = pneg %p44
        %p224 = pneg %p41
        %p225 = scmp.lt.s32.totalorder %s20, 1
        %s226 = scalar_select %p225, %s20, 1
        %s227 = smul.addr %s226, 64
        %s228 = smul.addr %s227, 8
        %s229 = scalar_lea.vmem %s1, %s228
        %p230 = pneg %p70
        %p231 = pneg %p67
        %p232 = scmp.lt.s32.totalorder %s20, 1
        %s233 = scalar_select %p232, %s20, 1
        %s234 = smul.addr %s233, 4
        %s235 = smul.addr %s234, 2
        %s236 = scalar_lea.vmem %s2, %s235
        %p237 = pneg %p96
        %p238 = pneg %p93
        %s239 = smul.u32 2, %s21
        %p240 = scmp.lt.s32.totalorder %s20, 1
        %s241 = scalar_select %p240, %s20, 1
        %p242 = scmp.lt.s32.totalorder %s239, 1
        %s243 = scalar_select %p242, %s239, 1
        %s244 = smul.addr %s241, 2
        %s245 = sadd.s32 %s243, %s244
        %s246 = smul.addr %s245, 4
        %s247 = scalar_lea.vmem %s3, %s246
        %p248 = pneg %p124
        %p249 = pneg %p121
        %p250 = pneg %p152
        %p251 = pneg %p149
        %s252 = smul.u32 2, %s21
        %p253 = scmp.lt.s32.totalorder %s20, 1
        %s254 = scalar_select %p253, %s20, 1
        %p255 = scmp.lt.s32.totalorder %s252, 1
        %s256 = scalar_select %p255, %s252, 1
        %s257 = smul.addr %s254, 2
        %s258 = sadd.s32 %s256, %s257
        %s259 = smul.addr %s258, 4
        %s260 = scalar_lea.vmem %s4, %s259
        %p261 = scmp.lt.s32.totalorder %s20, 1
        %s262 = scalar_select %p261, %s20, 1
        %s263 = smul.addr %s262, 64
        %s264 = smul.addr %s263, 8
        %s265 = scalar_lea.vmem %s1, %s264
        %p266 = scmp.lt.s32.totalorder %s20, 1
        %s267 = scalar_select %p266, %s20, 1
        %s268 = smul.addr %s267, 4
        %s269 = smul.addr %s268, 2
        %s270 = scalar_lea.vmem %s2, %s269
        %s271 = smul.u32 2, %s21
        %p272 = scmp.lt.s32.totalorder %s20, 1
        %s273 = scalar_select %p272, %s20, 1
        %p274 = scmp.lt.s32.totalorder %s271, 1
        %s275 = scalar_select %p274, %s271, 1
        %s276 = smul.addr %s273, 2
        %s277 = sadd.s32 %s275, %s276
        %s278 = smul.addr %s277, 4
        %s279 = scalar_lea.vmem %s3, %s278
        %s280 = smul.u32 2, %s21
        %s281 = smul.u32 2, %s21
        %p282 = scmp.lt.s32.totalorder %s20, 1
        %s283 = scalar_select %p282, %s20, 1
        %p284 = scmp.lt.s32.totalorder %s281, 1
        %s285 = scalar_select %p284, %s281, 1
        %s286 = smul.addr %s283, 2
        %s287 = sadd.s32 %s285, %s286
        %s288 = smul.addr %s287, 4
        %s289 = scalar_lea.vmem %s4, %s288
        %s290 = smul.u32 2, %s21
        %v291 = vld [vmem:[%s265] sm:$0xff]
        %v292 = vld [vmem:[%s265 + $0x8] sm:$0xff]
        %v293 = vld [vmem:[%s265 + $0x10] sm:$0xff]
        %v294 = vld [vmem:[%s265 + $0x18] sm:$0xff]
        %v295 = vld [vmem:[%s265 + $0x20] sm:$0xff]
        %v296 = vld [vmem:[%s265 + $0x28] sm:$0xff]
        %v297 = vld [vmem:[%s265 + $0x30] sm:$0xff]
        %v298 = vld [vmem:[%s265 + $0x38] sm:$0xff]
        %v299 = vld [vmem:[%s265 + $0x40] sm:$0xff]
        %v300 = vld [vmem:[%s265 + $0x48] sm:$0xff]
        %v301 = vld [vmem:[%s265 + $0x50] sm:$0xff]
        %v302 = vld [vmem:[%s265 + $0x58] sm:$0xff]
        %v303 = vld [vmem:[%s265 + $0x60] sm:$0xff]
        %v304 = vld [vmem:[%s265 + $0x68] sm:$0xff]
        %v305 = vld [vmem:[%s265 + $0x70] sm:$0xff]
        %v306 = vld [vmem:[%s265 + $0x78] sm:$0xff]
        %v307 = vld [vmem:[%s265 + $0x80] sm:$0xff]
        %v308 = vld [vmem:[%s265 + $0x88] sm:$0xff]
        %v309 = vld [vmem:[%s265 + $0x90] sm:$0xff]
        %v310 = vld [vmem:[%s265 + $0x98] sm:$0xff]
        %v311 = vld [vmem:[%s265 + $0xa0] sm:$0xff]
        %v312 = vld [vmem:[%s265 + $0xa8] sm:$0xff]
        %v313 = vld [vmem:[%s265 + $0xb0] sm:$0xff]
        %v314 = vld [vmem:[%s265 + $0xb8] sm:$0xff]
        %v315 = vld [vmem:[%s265 + $0xc0] sm:$0xff]
        %v316 = vld [vmem:[%s265 + $0xc8] sm:$0xff]
        %v317 = vld [vmem:[%s265 + $0xd0] sm:$0xff]
        %v318 = vld [vmem:[%s265 + $0xd8] sm:$0xff]
        %v319 = vld [vmem:[%s265 + $0xe0] sm:$0xff]
        %v320 = vld [vmem:[%s265 + $0xe8] sm:$0xff]
        %v321 = vld [vmem:[%s265 + $0xf0] sm:$0xff]
        %v322 = vld [vmem:[%s265 + $0xf8] sm:$0xff]
        %v323 = vld [vmem:[%s265 + $0x100] sm:$0xff]
        %v324 = vld [vmem:[%s265 + $0x108] sm:$0xff]
        %v325 = vld [vmem:[%s265 + $0x110] sm:$0xff]
        %v326 = vld [vmem:[%s265 + $0x118] sm:$0xff]
        %v327 = vld [vmem:[%s265 + $0x120] sm:$0xff]
        %v328 = vld [vmem:[%s265 + $0x128] sm:$0xff]
        %v329 = vld [vmem:[%s265 + $0x130] sm:$0xff]
        %v330 = vld [vmem:[%s265 + $0x138] sm:$0xff]
        %v331 = vld [vmem:[%s265 + $0x140] sm:$0xff]
        %v332 = vld [vmem:[%s265 + $0x148] sm:$0xff]
        %v333 = vld [vmem:[%s265 + $0x150] sm:$0xff]
        %v334 = vld [vmem:[%s265 + $0x158] sm:$0xff]
        %v335 = vld [vmem:[%s265 + $0x160] sm:$0xff]
        %v336 = vld [vmem:[%s265 + $0x168] sm:$0xff]
        %v337 = vld [vmem:[%s265 + $0x170] sm:$0xff]
        %v338 = vld [vmem:[%s265 + $0x178] sm:$0xff]
        %v339 = vld [vmem:[%s265 + $0x180] sm:$0xff]
        %v340 = vld [vmem:[%s265 + $0x188] sm:$0xff]
        %v341 = vld [vmem:[%s265 + $0x190] sm:$0xff]
        %v342 = vld [vmem:[%s265 + $0x198] sm:$0xff]
        %v343 = vld [vmem:[%s265 + $0x1a0] sm:$0xff]
        %v344 = vld [vmem:[%s265 + $0x1a8] sm:$0xff]
        %v345 = vld [vmem:[%s265 + $0x1b0] sm:$0xff]
        %v346 = vld [vmem:[%s265 + $0x1b8] sm:$0xff]
        %v347 = vld [vmem:[%s265 + $0x1c0] sm:$0xff]
        %v348 = vld [vmem:[%s265 + $0x1c8] sm:$0xff]
        %v349 = vld [vmem:[%s265 + $0x1d0] sm:$0xff]
        %v350 = vld [vmem:[%s265 + $0x1d8] sm:$0xff]
        %v351 = vld [vmem:[%s265 + $0x1e0] sm:$0xff]
        %v352 = vld [vmem:[%s265 + $0x1e8] sm:$0xff]
        %v353 = vld [vmem:[%s265 + $0x1f0] sm:$0xff]
        %v354 = vld [vmem:[%s265 + $0x1f8] sm:$0xff]
        %s355 = smul.u32 %s21, 256
        %v356 = vstv %s355
        %v357 = vsub.s32 %v291, %v356
        %v358 = vsub.s32 %v292, %v356
        %v359 = vsub.s32 %v293, %v356
        %v360 = vsub.s32 %v294, %v356
        %v361 = vsub.s32 %v295, %v356
        %v362 = vsub.s32 %v296, %v356
        %v363 = vsub.s32 %v297, %v356
        %v364 = vsub.s32 %v298, %v356
        %v365 = vsub.s32 %v299, %v356
        %v366 = vsub.s32 %v300, %v356
        %v367 = vsub.s32 %v301, %v356
        %v368 = vsub.s32 %v302, %v356
        %v369 = vsub.s32 %v303, %v356
        %v370 = vsub.s32 %v304, %v356
        %v371 = vsub.s32 %v305, %v356
        %v372 = vsub.s32 %v306, %v356
        %v373 = vsub.s32 %v307, %v356
        %v374 = vsub.s32 %v308, %v356
        %v375 = vsub.s32 %v309, %v356
        %v376 = vsub.s32 %v310, %v356
        %v377 = vsub.s32 %v311, %v356
        %v378 = vsub.s32 %v312, %v356
        %v379 = vsub.s32 %v313, %v356
        %v380 = vsub.s32 %v314, %v356
        %v381 = vsub.s32 %v315, %v356
        %v382 = vsub.s32 %v316, %v356
        %v383 = vsub.s32 %v317, %v356
        %v384 = vsub.s32 %v318, %v356
        %v385 = vsub.s32 %v319, %v356
        %v386 = vsub.s32 %v320, %v356
        %v387 = vsub.s32 %v321, %v356
        %v388 = vsub.s32 %v322, %v356
        %v389 = vsub.s32 %v323, %v356
        %v390 = vsub.s32 %v324, %v356
        %v391 = vsub.s32 %v325, %v356
        %v392 = vsub.s32 %v326, %v356
        %v393 = vsub.s32 %v327, %v356
        %v394 = vsub.s32 %v328, %v356
        %v395 = vsub.s32 %v329, %v356
        %v396 = vsub.s32 %v330, %v356
        %v397 = vsub.s32 %v331, %v356
        %v398 = vsub.s32 %v332, %v356
        %v399 = vsub.s32 %v333, %v356
        %v400 = vsub.s32 %v334, %v356
        %v401 = vsub.s32 %v335, %v356
        %v402 = vsub.s32 %v336, %v356
        %v403 = vsub.s32 %v337, %v356
        %v404 = vsub.s32 %v338, %v356
        %v405 = vsub.s32 %v339, %v356
        %v406 = vsub.s32 %v340, %v356
        %v407 = vsub.s32 %v341, %v356
        %v408 = vsub.s32 %v342, %v356
        %v409 = vsub.s32 %v343, %v356
        %v410 = vsub.s32 %v344, %v356
        %v411 = vsub.s32 %v345, %v356
        %v412 = vsub.s32 %v346, %v356
        %v413 = vsub.s32 %v347, %v356
        %v414 = vsub.s32 %v348, %v356
        %v415 = vsub.s32 %v349, %v356
        %v416 = vsub.s32 %v350, %v356
        %v417 = vsub.s32 %v351, %v356
        %v418 = vsub.s32 %v352, %v356
        %v419 = vsub.s32 %v353, %v356
        %v420 = vsub.s32 %v354, %v356
        %v421 = vlaneseq
        %v422 = vand.u32 %v421, 127
        %v423 = vadd.s32 %v422, 128
        %424 = vset.pattern.permute.xlu0 0
        %425 = vperm.xlu0 %424, %v357
        %v426 = vpop.permute.xlu0 %425
        %427 = vset.pattern.permute.xlu0 0
        %428 = vperm.xlu0 %427, %v358
        %v429 = vpop.permute.xlu0 %428
        %430 = vset.pattern.permute.xlu0 0
        %431 = vperm.xlu0 %430, %v359
        %v432 = vpop.permute.xlu0 %431
        %433 = vset.pattern.permute.xlu0 0
        %434 = vperm.xlu0 %433, %v360
        %v435 = vpop.permute.xlu0 %434
        %436 = vset.pattern.permute.xlu0 0
        %437 = vperm.xlu0 %436, %v361
        %v438 = vpop.permute.xlu0 %437
        %439 = vset.pattern.permute.xlu0 0
        %440 = vperm.xlu0 %439, %v362
        %v441 = vpop.permute.xlu0 %440
        %442 = vset.pattern.permute.xlu0 0
        %443 = vperm.xlu0 %442, %v363
        %v444 = vpop.permute.xlu0 %443
        %445 = vset.pattern.permute.xlu0 0
        %446 = vperm.xlu0 %445, %v364
        %v447 = vpop.permute.xlu0 %446
        %448 = vset.pattern.permute.xlu0 0
        %449 = vperm.xlu0 %448, %v365
        %v450 = vpop.permute.xlu0 %449
        %451 = vset.pattern.permute.xlu0 0
        %452 = vperm.xlu0 %451, %v366
        %v453 = vpop.permute.xlu0 %452
        %454 = vset.pattern.permute.xlu0 0
        %455 = vperm.xlu0 %454, %v367
        %v456 = vpop.permute.xlu0 %455
        %457 = vset.pattern.permute.xlu0 0
        %458 = vperm.xlu0 %457, %v368
        %v459 = vpop.permute.xlu0 %458
        %460 = vset.pattern.permute.xlu0 0
        %461 = vperm.xlu0 %460, %v369
        %v462 = vpop.permute.xlu0 %461
        %463 = vset.pattern.permute.xlu0 0
        %464 = vperm.xlu0 %463, %v370
        %v465 = vpop.permute.xlu0 %464
        %466 = vset.pattern.permute.xlu0 0
        %467 = vperm.xlu0 %466, %v371
        %v468 = vpop.permute.xlu0 %467
        %469 = vset.pattern.permute.xlu0 0
        %470 = vperm.xlu0 %469, %v372
        %v471 = vpop.permute.xlu0 %470
        %472 = vset.pattern.permute.xlu0 0
        %473 = vperm.xlu0 %472, %v373
        %v474 = vpop.permute.xlu0 %473
        %475 = vset.pattern.permute.xlu0 0
        %476 = vperm.xlu0 %475, %v374
        %v477 = vpop.permute.xlu0 %476
        %478 = vset.pattern.permute.xlu0 0
        %479 = vperm.xlu0 %478, %v375
        %v480 = vpop.permute.xlu0 %479
        %481 = vset.pattern.permute.xlu0 0
        %482 = vperm.xlu0 %481, %v376
        %v483 = vpop.permute.xlu0 %482
        %484 = vset.pattern.permute.xlu0 0
        %485 = vperm.xlu0 %484, %v377
        %v486 = vpop.permute.xlu0 %485
        %487 = vset.pattern.permute.xlu0 0
        %488 = vperm.xlu0 %487, %v378
        %v489 = vpop.permute.xlu0 %488
        %490 = vset.pattern.permute.xlu0 0
        %491 = vperm.xlu0 %490, %v379
        %v492 = vpop.permute.xlu0 %491
        %493 = vset.pattern.permute.xlu0 0
        %494 = vperm.xlu0 %493, %v380
        %v495 = vpop.permute.xlu0 %494
        %496 = vset.pattern.permute.xlu0 0
        %497 = vperm.xlu0 %496, %v381
        %v498 = vpop.permute.xlu0 %497
        %499 = vset.pattern.permute.xlu0 0
        %500 = vperm.xlu0 %499, %v382
        %v501 = vpop.permute.xlu0 %500
        %502 = vset.pattern.permute.xlu0 0
        %503 = vperm.xlu0 %502, %v383
        %v504 = vpop.permute.xlu0 %503
        %505 = vset.pattern.permute.xlu0 0
        %506 = vperm.xlu0 %505, %v384
        %v507 = vpop.permute.xlu0 %506
        %508 = vset.pattern.permute.xlu0 0
        %509 = vperm.xlu0 %508, %v385
        %v510 = vpop.permute.xlu0 %509
        %511 = vset.pattern.permute.xlu0 0
        %512 = vperm.xlu0 %511, %v386
        %v513 = vpop.permute.xlu0 %512
        %514 = vset.pattern.permute.xlu0 0
        %515 = vperm.xlu0 %514, %v387
        %v516 = vpop.permute.xlu0 %515
        %517 = vset.pattern.permute.xlu0 0
        %518 = vperm.xlu0 %517, %v388
        %v519 = vpop.permute.xlu0 %518
        %520 = vset.pattern.permute.xlu0 0
        %521 = vperm.xlu0 %520, %v389
        %v522 = vpop.permute.xlu0 %521
        %523 = vset.pattern.permute.xlu0 0
        %524 = vperm.xlu0 %523, %v390
        %v525 = vpop.permute.xlu0 %524
        %526 = vset.pattern.permute.xlu0 0
        %527 = vperm.xlu0 %526, %v391
        %v528 = vpop.permute.xlu0 %527
        %529 = vset.pattern.permute.xlu0 0
        %530 = vperm.xlu0 %529, %v392
        %v531 = vpop.permute.xlu0 %530
        %532 = vset.pattern.permute.xlu0 0
        %533 = vperm.xlu0 %532, %v393
        %v534 = vpop.permute.xlu0 %533
        %535 = vset.pattern.permute.xlu0 0
        %536 = vperm.xlu0 %535, %v394
        %v537 = vpop.permute.xlu0 %536
        %538 = vset.pattern.permute.xlu0 0
        %539 = vperm.xlu0 %538, %v395
        %v540 = vpop.permute.xlu0 %539
        %541 = vset.pattern.permute.xlu0 0
        %542 = vperm.xlu0 %541, %v396
        %v543 = vpop.permute.xlu0 %542
        %544 = vset.pattern.permute.xlu0 0
        %545 = vperm.xlu0 %544, %v397
        %v546 = vpop.permute.xlu0 %545
        %547 = vset.pattern.permute.xlu0 0
        %548 = vperm.xlu0 %547, %v398
        %v549 = vpop.permute.xlu0 %548
        %550 = vset.pattern.permute.xlu0 0
        %551 = vperm.xlu0 %550, %v399
        %v552 = vpop.permute.xlu0 %551
        %553 = vset.pattern.permute.xlu0 0
        %554 = vperm.xlu0 %553, %v400
        %v555 = vpop.permute.xlu0 %554
        %556 = vset.pattern.permute.xlu0 0
        %557 = vperm.xlu0 %556, %v401
        %v558 = vpop.permute.xlu0 %557
        %559 = vset.pattern.permute.xlu0 0
        %560 = vperm.xlu0 %559, %v402
        %v561 = vpop.permute.xlu0 %560
        %562 = vset.pattern.permute.xlu0 0
        %563 = vperm.xlu0 %562, %v403
        %v564 = vpop.permute.xlu0 %563
        %565 = vset.pattern.permute.xlu0 0
        %566 = vperm.xlu0 %565, %v404
        %v567 = vpop.permute.xlu0 %566
        %568 = vset.pattern.permute.xlu0 0
        %569 = vperm.xlu0 %568, %v405
        %v570 = vpop.permute.xlu0 %569
        %571 = vset.pattern.permute.xlu0 0
        %572 = vperm.xlu0 %571, %v406
        %v573 = vpop.permute.xlu0 %572
        %574 = vset.pattern.permute.xlu0 0
        %575 = vperm.xlu0 %574, %v407
        %v576 = vpop.permute.xlu0 %575
        %577 = vset.pattern.permute.xlu0 0
        %578 = vperm.xlu0 %577, %v408
        %v579 = vpop.permute.xlu0 %578
        %580 = vset.pattern.permute.xlu0 0
        %581 = vperm.xlu0 %580, %v409
        %v582 = vpop.permute.xlu0 %581
        %583 = vset.pattern.permute.xlu0 0
        %584 = vperm.xlu0 %583, %v410
        %v585 = vpop.permute.xlu0 %584
        %586 = vset.pattern.permute.xlu0 0
        %587 = vperm.xlu0 %586, %v411
        %v588 = vpop.permute.xlu0 %587
        %589 = vset.pattern.permute.xlu0 0
        %590 = vperm.xlu0 %589, %v412
        %v591 = vpop.permute.xlu0 %590
        %592 = vset.pattern.permute.xlu0 0
        %593 = vperm.xlu0 %592, %v413
        %v594 = vpop.permute.xlu0 %593
        %595 = vset.pattern.permute.xlu0 0
        %596 = vperm.xlu0 %595, %v414
        %v597 = vpop.permute.xlu0 %596
        %598 = vset.pattern.permute.xlu0 0
        %599 = vperm.xlu0 %598, %v415
        %v600 = vpop.permute.xlu0 %599
        %601 = vset.pattern.permute.xlu0 0
        %602 = vperm.xlu0 %601, %v416
        %v603 = vpop.permute.xlu0 %602
        %604 = vset.pattern.permute.xlu0 0
        %605 = vperm.xlu0 %604, %v417
        %v606 = vpop.permute.xlu0 %605
        %607 = vset.pattern.permute.xlu0 0
        %608 = vperm.xlu0 %607, %v418
        %v609 = vpop.permute.xlu0 %608
        %610 = vset.pattern.permute.xlu0 0
        %611 = vperm.xlu0 %610, %v419
        %v612 = vpop.permute.xlu0 %611
        %613 = vset.pattern.permute.xlu0 0
        %614 = vperm.xlu0 %613, %v420
        %v615 = vpop.permute.xlu0 %614
        %vm616 = vcmp.eq.s32.totalorder %v426, %v422
        %vm617 = vcmp.eq.s32.totalorder %v426, %v423
        %vm618 = vcmp.eq.s32.totalorder %v429, %v422
        %vm619 = vcmp.eq.s32.totalorder %v429, %v423
        %vm620 = vcmp.eq.s32.totalorder %v432, %v422
        %vm621 = vcmp.eq.s32.totalorder %v432, %v423
        %vm622 = vcmp.eq.s32.totalorder %v435, %v422
        %vm623 = vcmp.eq.s32.totalorder %v435, %v423
        %vm624 = vcmp.eq.s32.totalorder %v438, %v422
        %vm625 = vcmp.eq.s32.totalorder %v438, %v423
        %vm626 = vcmp.eq.s32.totalorder %v441, %v422
        %vm627 = vcmp.eq.s32.totalorder %v441, %v423
        %vm628 = vcmp.eq.s32.totalorder %v444, %v422
        %vm629 = vcmp.eq.s32.totalorder %v444, %v423
        %vm630 = vcmp.eq.s32.totalorder %v447, %v422
        %vm631 = vcmp.eq.s32.totalorder %v447, %v423
        %vm632 = vcmp.eq.s32.totalorder %v450, %v422
        %vm633 = vcmp.eq.s32.totalorder %v450, %v423
        %vm634 = vcmp.eq.s32.totalorder %v453, %v422
        %vm635 = vcmp.eq.s32.totalorder %v453, %v423
        %vm636 = vcmp.eq.s32.totalorder %v456, %v422
        %vm637 = vcmp.eq.s32.totalorder %v456, %v423
        %vm638 = vcmp.eq.s32.totalorder %v459, %v422
        %vm639 = vcmp.eq.s32.totalorder %v459, %v423
        %vm640 = vcmp.eq.s32.totalorder %v462, %v422
        %vm641 = vcmp.eq.s32.totalorder %v462, %v423
        %vm642 = vcmp.eq.s32.totalorder %v465, %v422
        %vm643 = vcmp.eq.s32.totalorder %v465, %v423
        %vm644 = vcmp.eq.s32.totalorder %v468, %v422
        %vm645 = vcmp.eq.s32.totalorder %v468, %v423
        %vm646 = vcmp.eq.s32.totalorder %v471, %v422
        %vm647 = vcmp.eq.s32.totalorder %v471, %v423
        %vm648 = vcmp.eq.s32.totalorder %v474, %v422
        %vm649 = vcmp.eq.s32.totalorder %v474, %v423
        %vm650 = vcmp.eq.s32.totalorder %v477, %v422
        %vm651 = vcmp.eq.s32.totalorder %v477, %v423
        %vm652 = vcmp.eq.s32.totalorder %v480, %v422
        %vm653 = vcmp.eq.s32.totalorder %v480, %v423
        %vm654 = vcmp.eq.s32.totalorder %v483, %v422
        %vm655 = vcmp.eq.s32.totalorder %v483, %v423
        %vm656 = vcmp.eq.s32.totalorder %v486, %v422
        %vm657 = vcmp.eq.s32.totalorder %v486, %v423
        %vm658 = vcmp.eq.s32.totalorder %v489, %v422
        %vm659 = vcmp.eq.s32.totalorder %v489, %v423
        %vm660 = vcmp.eq.s32.totalorder %v492, %v422
        %vm661 = vcmp.eq.s32.totalorder %v492, %v423
        %vm662 = vcmp.eq.s32.totalorder %v495, %v422
        %vm663 = vcmp.eq.s32.totalorder %v495, %v423
        %vm664 = vcmp.eq.s32.totalorder %v498, %v422
        %vm665 = vcmp.eq.s32.totalorder %v498, %v423
        %vm666 = vcmp.eq.s32.totalorder %v501, %v422
        %vm667 = vcmp.eq.s32.totalorder %v501, %v423
        %vm668 = vcmp.eq.s32.totalorder %v504, %v422
        %vm669 = vcmp.eq.s32.totalorder %v504, %v423
        %vm670 = vcmp.eq.s32.totalorder %v507, %v422
        %vm671 = vcmp.eq.s32.totalorder %v507, %v423
        %vm672 = vcmp.eq.s32.totalorder %v510, %v422
        %vm673 = vcmp.eq.s32.totalorder %v510, %v423
        %vm674 = vcmp.eq.s32.totalorder %v513, %v422
        %vm675 = vcmp.eq.s32.totalorder %v513, %v423
        %vm676 = vcmp.eq.s32.totalorder %v516, %v422
        %vm677 = vcmp.eq.s32.totalorder %v516, %v423
        %vm678 = vcmp.eq.s32.totalorder %v519, %v422
        %vm679 = vcmp.eq.s32.totalorder %v519, %v423
        %vm680 = vcmp.eq.s32.totalorder %v522, %v422
        %vm681 = vcmp.eq.s32.totalorder %v522, %v423
        %vm682 = vcmp.eq.s32.totalorder %v525, %v422
        %vm683 = vcmp.eq.s32.totalorder %v525, %v423
        %vm684 = vcmp.eq.s32.totalorder %v528, %v422
        %vm685 = vcmp.eq.s32.totalorder %v528, %v423
        %vm686 = vcmp.eq.s32.totalorder %v531, %v422
        %vm687 = vcmp.eq.s32.totalorder %v531, %v423
        %vm688 = vcmp.eq.s32.totalorder %v534, %v422
        %vm689 = vcmp.eq.s32.totalorder %v534, %v423
        %vm690 = vcmp.eq.s32.totalorder %v537, %v422
        %vm691 = vcmp.eq.s32.totalorder %v537, %v423
        %vm692 = vcmp.eq.s32.totalorder %v540, %v422
        %vm693 = vcmp.eq.s32.totalorder %v540, %v423
        %vm694 = vcmp.eq.s32.totalorder %v543, %v422
        %vm695 = vcmp.eq.s32.totalorder %v543, %v423
        %vm696 = vcmp.eq.s32.totalorder %v546, %v422
        %vm697 = vcmp.eq.s32.totalorder %v546, %v423
        %vm698 = vcmp.eq.s32.totalorder %v549, %v422
        %vm699 = vcmp.eq.s32.totalorder %v549, %v423
        %vm700 = vcmp.eq.s32.totalorder %v552, %v422
        %vm701 = vcmp.eq.s32.totalorder %v552, %v423
        %vm702 = vcmp.eq.s32.totalorder %v555, %v422
        %vm703 = vcmp.eq.s32.totalorder %v555, %v423
        %vm704 = vcmp.eq.s32.totalorder %v558, %v422
        %vm705 = vcmp.eq.s32.totalorder %v558, %v423
        %vm706 = vcmp.eq.s32.totalorder %v561, %v422
        %vm707 = vcmp.eq.s32.totalorder %v561, %v423
        %vm708 = vcmp.eq.s32.totalorder %v564, %v422
        %vm709 = vcmp.eq.s32.totalorder %v564, %v423
        %vm710 = vcmp.eq.s32.totalorder %v567, %v422
        %vm711 = vcmp.eq.s32.totalorder %v567, %v423
        %vm712 = vcmp.eq.s32.totalorder %v570, %v422
        %vm713 = vcmp.eq.s32.totalorder %v570, %v423
        %vm714 = vcmp.eq.s32.totalorder %v573, %v422
        %vm715 = vcmp.eq.s32.totalorder %v573, %v423
        %vm716 = vcmp.eq.s32.totalorder %v576, %v422
        %vm717 = vcmp.eq.s32.totalorder %v576, %v423
        %vm718 = vcmp.eq.s32.totalorder %v579, %v422
        %vm719 = vcmp.eq.s32.totalorder %v579, %v423
        %vm720 = vcmp.eq.s32.totalorder %v582, %v422
        %vm721 = vcmp.eq.s32.totalorder %v582, %v423
        %vm722 = vcmp.eq.s32.totalorder %v585, %v422
        %vm723 = vcmp.eq.s32.totalorder %v585, %v423
        %vm724 = vcmp.eq.s32.totalorder %v588, %v422
        %vm725 = vcmp.eq.s32.totalorder %v588, %v423
        %vm726 = vcmp.eq.s32.totalorder %v591, %v422
        %vm727 = vcmp.eq.s32.totalorder %v591, %v423
        %vm728 = vcmp.eq.s32.totalorder %v594, %v422
        %vm729 = vcmp.eq.s32.totalorder %v594, %v423
        %vm730 = vcmp.eq.s32.totalorder %v597, %v422
        %vm731 = vcmp.eq.s32.totalorder %v597, %v423
        %vm732 = vcmp.eq.s32.totalorder %v600, %v422
        %vm733 = vcmp.eq.s32.totalorder %v600, %v423
        %vm734 = vcmp.eq.s32.totalorder %v603, %v422
        %vm735 = vcmp.eq.s32.totalorder %v603, %v423
        %vm736 = vcmp.eq.s32.totalorder %v606, %v422
        %vm737 = vcmp.eq.s32.totalorder %v606, %v423
        %vm738 = vcmp.eq.s32.totalorder %v609, %v422
        %vm739 = vcmp.eq.s32.totalorder %v609, %v423
        %vm740 = vcmp.eq.s32.totalorder %v612, %v422
        %vm741 = vcmp.eq.s32.totalorder %v612, %v423
        %vm742 = vcmp.eq.s32.totalorder %v615, %v422
        %vm743 = vcmp.eq.s32.totalorder %v615, %v423
        %v744 = vsel %vm616, 1, 0
        %v745 = vsel %vm617, 1, 0
        %v746 = vsel %vm618, 1, 0
        %v747 = vsel %vm619, 1, 0
        %v748 = vsel %vm620, 1, 0
        %v749 = vsel %vm621, 1, 0
        %v750 = vsel %vm622, 1, 0
        %v751 = vsel %vm623, 1, 0
        %v752 = vsel %vm624, 1, 0
        %v753 = vsel %vm625, 1, 0
        %v754 = vsel %vm626, 1, 0
        %v755 = vsel %vm627, 1, 0
        %v756 = vsel %vm628, 1, 0
        %v757 = vsel %vm629, 1, 0
        %v758 = vsel %vm630, 1, 0
        %v759 = vsel %vm631, 1, 0
        %v760 = vsel %vm632, 1, 0
        %v761 = vsel %vm633, 1, 0
        %v762 = vsel %vm634, 1, 0
        %v763 = vsel %vm635, 1, 0
        %v764 = vsel %vm636, 1, 0
        %v765 = vsel %vm637, 1, 0
        %v766 = vsel %vm638, 1, 0
        %v767 = vsel %vm639, 1, 0
        %v768 = vsel %vm640, 1, 0
        %v769 = vsel %vm641, 1, 0
        %v770 = vsel %vm642, 1, 0
        %v771 = vsel %vm643, 1, 0
        %v772 = vsel %vm644, 1, 0
        %v773 = vsel %vm645, 1, 0
        %v774 = vsel %vm646, 1, 0
        %v775 = vsel %vm647, 1, 0
        %v776 = vsel %vm648, 1, 0
        %v777 = vsel %vm649, 1, 0
        %v778 = vsel %vm650, 1, 0
        %v779 = vsel %vm651, 1, 0
        %v780 = vsel %vm652, 1, 0
        %v781 = vsel %vm653, 1, 0
        %v782 = vsel %vm654, 1, 0
        %v783 = vsel %vm655, 1, 0
        %v784 = vsel %vm656, 1, 0
        %v785 = vsel %vm657, 1, 0
        %v786 = vsel %vm658, 1, 0
        %v787 = vsel %vm659, 1, 0
        %v788 = vsel %vm660, 1, 0
        %v789 = vsel %vm661, 1, 0
        %v790 = vsel %vm662, 1, 0
        %v791 = vsel %vm663, 1, 0
        %v792 = vsel %vm664, 1, 0
        %v793 = vsel %vm665, 1, 0
        %v794 = vsel %vm666, 1, 0
        %v795 = vsel %vm667, 1, 0
        %v796 = vsel %vm668, 1, 0
        %v797 = vsel %vm669, 1, 0
        %v798 = vsel %vm670, 1, 0
        %v799 = vsel %vm671, 1, 0
        %v800 = vsel %vm672, 1, 0
        %v801 = vsel %vm673, 1, 0
        %v802 = vsel %vm674, 1, 0
        %v803 = vsel %vm675, 1, 0
        %v804 = vsel %vm676, 1, 0
        %v805 = vsel %vm677, 1, 0
        %v806 = vsel %vm678, 1, 0
        %v807 = vsel %vm679, 1, 0
        %v808 = vsel %vm680, 1, 0
        %v809 = vsel %vm681, 1, 0
        %v810 = vsel %vm682, 1, 0
        %v811 = vsel %vm683, 1, 0
        %v812 = vsel %vm684, 1, 0
        %v813 = vsel %vm685, 1, 0
        %v814 = vsel %vm686, 1, 0
        %v815 = vsel %vm687, 1, 0
        %v816 = vsel %vm688, 1, 0
        %v817 = vsel %vm689, 1, 0
        %v818 = vsel %vm690, 1, 0
        %v819 = vsel %vm691, 1, 0
        %v820 = vsel %vm692, 1, 0
        %v821 = vsel %vm693, 1, 0
        %v822 = vsel %vm694, 1, 0
        %v823 = vsel %vm695, 1, 0
        %v824 = vsel %vm696, 1, 0
        %v825 = vsel %vm697, 1, 0
        %v826 = vsel %vm698, 1, 0
        %v827 = vsel %vm699, 1, 0
        %v828 = vsel %vm700, 1, 0
        %v829 = vsel %vm701, 1, 0
        %v830 = vsel %vm702, 1, 0
        %v831 = vsel %vm703, 1, 0
        %v832 = vsel %vm704, 1, 0
        %v833 = vsel %vm705, 1, 0
        %v834 = vsel %vm706, 1, 0
        %v835 = vsel %vm707, 1, 0
        %v836 = vsel %vm708, 1, 0
        %v837 = vsel %vm709, 1, 0
        %v838 = vsel %vm710, 1, 0
        %v839 = vsel %vm711, 1, 0
        %v840 = vsel %vm712, 1, 0
        %v841 = vsel %vm713, 1, 0
        %v842 = vsel %vm714, 1, 0
        %v843 = vsel %vm715, 1, 0
        %v844 = vsel %vm716, 1, 0
        %v845 = vsel %vm717, 1, 0
        %v846 = vsel %vm718, 1, 0
        %v847 = vsel %vm719, 1, 0
        %v848 = vsel %vm720, 1, 0
        %v849 = vsel %vm721, 1, 0
        %v850 = vsel %vm722, 1, 0
        %v851 = vsel %vm723, 1, 0
        %v852 = vsel %vm724, 1, 0
        %v853 = vsel %vm725, 1, 0
        %v854 = vsel %vm726, 1, 0
        %v855 = vsel %vm727, 1, 0
        %v856 = vsel %vm728, 1, 0
        %v857 = vsel %vm729, 1, 0
        %v858 = vsel %vm730, 1, 0
        %v859 = vsel %vm731, 1, 0
        %v860 = vsel %vm732, 1, 0
        %v861 = vsel %vm733, 1, 0
        %v862 = vsel %vm734, 1, 0
        %v863 = vsel %vm735, 1, 0
        %v864 = vsel %vm736, 1, 0
        %v865 = vsel %vm737, 1, 0
        %v866 = vsel %vm738, 1, 0
        %v867 = vsel %vm739, 1, 0
        %v868 = vsel %vm740, 1, 0
        %v869 = vsel %vm741, 1, 0
        %v870 = vsel %vm742, 1, 0
        %v871 = vsel %vm743, 1, 0
        %872 = vset.pattern.permute.xlu0 1
        %873 = vperm.xlu0 %872, %v357
        %v874 = vpop.permute.xlu0 %873
        %875 = vset.pattern.permute.xlu0 1
        %876 = vperm.xlu0 %875, %v358
        %v877 = vpop.permute.xlu0 %876
        %878 = vset.pattern.permute.xlu0 1
        %879 = vperm.xlu0 %878, %v359
        %v880 = vpop.permute.xlu0 %879
        %881 = vset.pattern.permute.xlu0 1
        %882 = vperm.xlu0 %881, %v360
        %v883 = vpop.permute.xlu0 %882
        %884 = vset.pattern.permute.xlu0 1
        %885 = vperm.xlu0 %884, %v361
        %v886 = vpop.permute.xlu0 %885
        %887 = vset.pattern.permute.xlu0 1
        %888 = vperm.xlu0 %887, %v362
        %v889 = vpop.permute.xlu0 %888
        %890 = vset.pattern.permute.xlu0 1
        %891 = vperm.xlu0 %890, %v363
        %v892 = vpop.permute.xlu0 %891
        %893 = vset.pattern.permute.xlu0 1
        %894 = vperm.xlu0 %893, %v364
        %v895 = vpop.permute.xlu0 %894
        %896 = vset.pattern.permute.xlu0 1
        %897 = vperm.xlu0 %896, %v365
        %v898 = vpop.permute.xlu0 %897
        %899 = vset.pattern.permute.xlu0 1
        %900 = vperm.xlu0 %899, %v366
        %v901 = vpop.permute.xlu0 %900
        %902 = vset.pattern.permute.xlu0 1
        %903 = vperm.xlu0 %902, %v367
        %v904 = vpop.permute.xlu0 %903
        %905 = vset.pattern.permute.xlu0 1
        %906 = vperm.xlu0 %905, %v368
        %v907 = vpop.permute.xlu0 %906
        %908 = vset.pattern.permute.xlu0 1
        %909 = vperm.xlu0 %908, %v369
        %v910 = vpop.permute.xlu0 %909
        %911 = vset.pattern.permute.xlu0 1
        %912 = vperm.xlu0 %911, %v370
        %v913 = vpop.permute.xlu0 %912
        %914 = vset.pattern.permute.xlu0 1
        %915 = vperm.xlu0 %914, %v371
        %v916 = vpop.permute.xlu0 %915
        %917 = vset.pattern.permute.xlu0 1
        %918 = vperm.xlu0 %917, %v372
        %v919 = vpop.permute.xlu0 %918
        %920 = vset.pattern.permute.xlu0 1
        %921 = vperm.xlu0 %920, %v373
        %v922 = vpop.permute.xlu0 %921
        %923 = vset.pattern.permute.xlu0 1
        %924 = vperm.xlu0 %923, %v374
        %v925 = vpop.permute.xlu0 %924
        %926 = vset.pattern.permute.xlu0 1
        %927 = vperm.xlu0 %926, %v375
        %v928 = vpop.permute.xlu0 %927
        %929 = vset.pattern.permute.xlu0 1
        %930 = vperm.xlu0 %929, %v376
        %v931 = vpop.permute.xlu0 %930
        %932 = vset.pattern.permute.xlu0 1
        %933 = vperm.xlu0 %932, %v377
        %v934 = vpop.permute.xlu0 %933
        %935 = vset.pattern.permute.xlu0 1
        %936 = vperm.xlu0 %935, %v378
        %v937 = vpop.permute.xlu0 %936
        %938 = vset.pattern.permute.xlu0 1
        %939 = vperm.xlu0 %938, %v379
        %v940 = vpop.permute.xlu0 %939
        %941 = vset.pattern.permute.xlu0 1
        %942 = vperm.xlu0 %941, %v380
        %v943 = vpop.permute.xlu0 %942
        %944 = vset.pattern.permute.xlu0 1
        %945 = vperm.xlu0 %944, %v381
        %v946 = vpop.permute.xlu0 %945
        %947 = vset.pattern.permute.xlu0 1
        %948 = vperm.xlu0 %947, %v382
        %v949 = vpop.permute.xlu0 %948
        %950 = vset.pattern.permute.xlu0 1
        %951 = vperm.xlu0 %950, %v383
        %v952 = vpop.permute.xlu0 %951
        %953 = vset.pattern.permute.xlu0 1
        %954 = vperm.xlu0 %953, %v384
        %v955 = vpop.permute.xlu0 %954
        %956 = vset.pattern.permute.xlu0 1
        %957 = vperm.xlu0 %956, %v385
        %v958 = vpop.permute.xlu0 %957
        %959 = vset.pattern.permute.xlu0 1
        %960 = vperm.xlu0 %959, %v386
        %v961 = vpop.permute.xlu0 %960
        %962 = vset.pattern.permute.xlu0 1
        %963 = vperm.xlu0 %962, %v387
        %v964 = vpop.permute.xlu0 %963
        %965 = vset.pattern.permute.xlu0 1
        %966 = vperm.xlu0 %965, %v388
        %v967 = vpop.permute.xlu0 %966
        %968 = vset.pattern.permute.xlu0 1
        %969 = vperm.xlu0 %968, %v389
        %v970 = vpop.permute.xlu0 %969
        %971 = vset.pattern.permute.xlu0 1
        %972 = vperm.xlu0 %971, %v390
        %v973 = vpop.permute.xlu0 %972
        %974 = vset.pattern.permute.xlu0 1
        %975 = vperm.xlu0 %974, %v391
        %v976 = vpop.permute.xlu0 %975
        %977 = vset.pattern.permute.xlu0 1
        %978 = vperm.xlu0 %977, %v392
        %v979 = vpop.permute.xlu0 %978
        %980 = vset.pattern.permute.xlu0 1
        %981 = vperm.xlu0 %980, %v393
        %v982 = vpop.permute.xlu0 %981
        %983 = vset.pattern.permute.xlu0 1
        %984 = vperm.xlu0 %983, %v394
        %v985 = vpop.permute.xlu0 %984
        %986 = vset.pattern.permute.xlu0 1
        %987 = vperm.xlu0 %986, %v395
        %v988 = vpop.permute.xlu0 %987
        %989 = vset.pattern.permute.xlu0 1
        %990 = vperm.xlu0 %989, %v396
        %v991 = vpop.permute.xlu0 %990
        %992 = vset.pattern.permute.xlu0 1
        %993 = vperm.xlu0 %992, %v397
        %v994 = vpop.permute.xlu0 %993
        %995 = vset.pattern.permute.xlu0 1
        %996 = vperm.xlu0 %995, %v398
        %v997 = vpop.permute.xlu0 %996
        %998 = vset.pattern.permute.xlu0 1
        %999 = vperm.xlu0 %998, %v399
        %v1000 = vpop.permute.xlu0 %999
        %1001 = vset.pattern.permute.xlu0 1
        %1002 = vperm.xlu0 %1001, %v400
        %v1003 = vpop.permute.xlu0 %1002
        %1004 = vset.pattern.permute.xlu0 1
        %1005 = vperm.xlu0 %1004, %v401
        %v1006 = vpop.permute.xlu0 %1005
        %1007 = vset.pattern.permute.xlu0 1
        %1008 = vperm.xlu0 %1007, %v402
        %v1009 = vpop.permute.xlu0 %1008
        %1010 = vset.pattern.permute.xlu0 1
        %1011 = vperm.xlu0 %1010, %v403
        %v1012 = vpop.permute.xlu0 %1011
        %1013 = vset.pattern.permute.xlu0 1
        %1014 = vperm.xlu0 %1013, %v404
        %v1015 = vpop.permute.xlu0 %1014
        %1016 = vset.pattern.permute.xlu0 1
        %1017 = vperm.xlu0 %1016, %v405
        %v1018 = vpop.permute.xlu0 %1017
        %1019 = vset.pattern.permute.xlu0 1
        %1020 = vperm.xlu0 %1019, %v406
        %v1021 = vpop.permute.xlu0 %1020
        %1022 = vset.pattern.permute.xlu0 1
        %1023 = vperm.xlu0 %1022, %v407
        %v1024 = vpop.permute.xlu0 %1023
        %1025 = vset.pattern.permute.xlu0 1
        %1026 = vperm.xlu0 %1025, %v408
        %v1027 = vpop.permute.xlu0 %1026
        %1028 = vset.pattern.permute.xlu0 1
        %1029 = vperm.xlu0 %1028, %v409
        %v1030 = vpop.permute.xlu0 %1029
        %1031 = vset.pattern.permute.xlu0 1
        %1032 = vperm.xlu0 %1031, %v410
        %v1033 = vpop.permute.xlu0 %1032
        %1034 = vset.pattern.permute.xlu0 1
        %1035 = vperm.xlu0 %1034, %v411
        %v1036 = vpop.permute.xlu0 %1035
        %1037 = vset.pattern.permute.xlu0 1
        %1038 = vperm.xlu0 %1037, %v412
        %v1039 = vpop.permute.xlu0 %1038
        %1040 = vset.pattern.permute.xlu0 1
        %1041 = vperm.xlu0 %1040, %v413
        %v1042 = vpop.permute.xlu0 %1041
        %1043 = vset.pattern.permute.xlu0 1
        %1044 = vperm.xlu0 %1043, %v414
        %v1045 = vpop.permute.xlu0 %1044
        %1046 = vset.pattern.permute.xlu0 1
        %1047 = vperm.xlu0 %1046, %v415
        %v1048 = vpop.permute.xlu0 %1047
        %1049 = vset.pattern.permute.xlu0 1
        %1050 = vperm.xlu0 %1049, %v416
        %v1051 = vpop.permute.xlu0 %1050
        %1052 = vset.pattern.permute.xlu0 1
        %1053 = vperm.xlu0 %1052, %v417
        %v1054 = vpop.permute.xlu0 %1053
        %1055 = vset.pattern.permute.xlu0 1
        %1056 = vperm.xlu0 %1055, %v418
        %v1057 = vpop.permute.xlu0 %1056
        %1058 = vset.pattern.permute.xlu0 1
        %1059 = vperm.xlu0 %1058, %v419
        %v1060 = vpop.permute.xlu0 %1059
        %1061 = vset.pattern.permute.xlu0 1
        %1062 = vperm.xlu0 %1061, %v420
        %v1063 = vpop.permute.xlu0 %1062
        %vm1064 = vcmp.eq.s32.totalorder %v874, %v422
        %vm1065 = vcmp.eq.s32.totalorder %v874, %v423
        %vm1066 = vcmp.eq.s32.totalorder %v877, %v422
        %vm1067 = vcmp.eq.s32.totalorder %v877, %v423
        %vm1068 = vcmp.eq.s32.totalorder %v880, %v422
        %vm1069 = vcmp.eq.s32.totalorder %v880, %v423
        %vm1070 = vcmp.eq.s32.totalorder %v883, %v422
        %vm1071 = vcmp.eq.s32.totalorder %v883, %v423
        %vm1072 = vcmp.eq.s32.totalorder %v886, %v422
        %vm1073 = vcmp.eq.s32.totalorder %v886, %v423
        %vm1074 = vcmp.eq.s32.totalorder %v889, %v422
        %vm1075 = vcmp.eq.s32.totalorder %v889, %v423
        %vm1076 = vcmp.eq.s32.totalorder %v892, %v422
        %vm1077 = vcmp.eq.s32.totalorder %v892, %v423
        %vm1078 = vcmp.eq.s32.totalorder %v895, %v422
        %vm1079 = vcmp.eq.s32.totalorder %v895, %v423
        %vm1080 = vcmp.eq.s32.totalorder %v898, %v422
        %vm1081 = vcmp.eq.s32.totalorder %v898, %v423
        %vm1082 = vcmp.eq.s32.totalorder %v901, %v422
        %vm1083 = vcmp.eq.s32.totalorder %v901, %v423
        %vm1084 = vcmp.eq.s32.totalorder %v904, %v422
        %vm1085 = vcmp.eq.s32.totalorder %v904, %v423
        %vm1086 = vcmp.eq.s32.totalorder %v907, %v422
        %vm1087 = vcmp.eq.s32.totalorder %v907, %v423
        %vm1088 = vcmp.eq.s32.totalorder %v910, %v422
        %vm1089 = vcmp.eq.s32.totalorder %v910, %v423
        %vm1090 = vcmp.eq.s32.totalorder %v913, %v422
        %vm1091 = vcmp.eq.s32.totalorder %v913, %v423
        %vm1092 = vcmp.eq.s32.totalorder %v916, %v422
        %vm1093 = vcmp.eq.s32.totalorder %v916, %v423
        %vm1094 = vcmp.eq.s32.totalorder %v919, %v422
        %vm1095 = vcmp.eq.s32.totalorder %v919, %v423
        %vm1096 = vcmp.eq.s32.totalorder %v922, %v422
        %vm1097 = vcmp.eq.s32.totalorder %v922, %v423
        %vm1098 = vcmp.eq.s32.totalorder %v925, %v422
        %vm1099 = vcmp.eq.s32.totalorder %v925, %v423
        %vm1100 = vcmp.eq.s32.totalorder %v928, %v422
        %vm1101 = vcmp.eq.s32.totalorder %v928, %v423
        %vm1102 = vcmp.eq.s32.totalorder %v931, %v422
        %vm1103 = vcmp.eq.s32.totalorder %v931, %v423
        %vm1104 = vcmp.eq.s32.totalorder %v934, %v422
        %vm1105 = vcmp.eq.s32.totalorder %v934, %v423
        %vm1106 = vcmp.eq.s32.totalorder %v937, %v422
        %vm1107 = vcmp.eq.s32.totalorder %v937, %v423
        %vm1108 = vcmp.eq.s32.totalorder %v940, %v422
        %vm1109 = vcmp.eq.s32.totalorder %v940, %v423
        %vm1110 = vcmp.eq.s32.totalorder %v943, %v422
        %vm1111 = vcmp.eq.s32.totalorder %v943, %v423
        %vm1112 = vcmp.eq.s32.totalorder %v946, %v422
        %vm1113 = vcmp.eq.s32.totalorder %v946, %v423
        %vm1114 = vcmp.eq.s32.totalorder %v949, %v422
        %vm1115 = vcmp.eq.s32.totalorder %v949, %v423
        %vm1116 = vcmp.eq.s32.totalorder %v952, %v422
        %vm1117 = vcmp.eq.s32.totalorder %v952, %v423
        %vm1118 = vcmp.eq.s32.totalorder %v955, %v422
        %vm1119 = vcmp.eq.s32.totalorder %v955, %v423
        %vm1120 = vcmp.eq.s32.totalorder %v958, %v422
        %vm1121 = vcmp.eq.s32.totalorder %v958, %v423
        %vm1122 = vcmp.eq.s32.totalorder %v961, %v422
        %vm1123 = vcmp.eq.s32.totalorder %v961, %v423
        %vm1124 = vcmp.eq.s32.totalorder %v964, %v422
        %vm1125 = vcmp.eq.s32.totalorder %v964, %v423
        %vm1126 = vcmp.eq.s32.totalorder %v967, %v422
        %vm1127 = vcmp.eq.s32.totalorder %v967, %v423
        %vm1128 = vcmp.eq.s32.totalorder %v970, %v422
        %vm1129 = vcmp.eq.s32.totalorder %v970, %v423
        %vm1130 = vcmp.eq.s32.totalorder %v973, %v422
        %vm1131 = vcmp.eq.s32.totalorder %v973, %v423
        %vm1132 = vcmp.eq.s32.totalorder %v976, %v422
        %vm1133 = vcmp.eq.s32.totalorder %v976, %v423
        %vm1134 = vcmp.eq.s32.totalorder %v979, %v422
        %vm1135 = vcmp.eq.s32.totalorder %v979, %v423
        %vm1136 = vcmp.eq.s32.totalorder %v982, %v422
        %vm1137 = vcmp.eq.s32.totalorder %v982, %v423
        %vm1138 = vcmp.eq.s32.totalorder %v985, %v422
        %vm1139 = vcmp.eq.s32.totalorder %v985, %v423
        %vm1140 = vcmp.eq.s32.totalorder %v988, %v422
        %vm1141 = vcmp.eq.s32.totalorder %v988, %v423
        %vm1142 = vcmp.eq.s32.totalorder %v991, %v422
        %vm1143 = vcmp.eq.s32.totalorder %v991, %v423
        %vm1144 = vcmp.eq.s32.totalorder %v994, %v422
        %vm1145 = vcmp.eq.s32.totalorder %v994, %v423
        %vm1146 = vcmp.eq.s32.totalorder %v997, %v422
        %vm1147 = vcmp.eq.s32.totalorder %v997, %v423
        %vm1148 = vcmp.eq.s32.totalorder %v1000, %v422
        %vm1149 = vcmp.eq.s32.totalorder %v1000, %v423
        %vm1150 = vcmp.eq.s32.totalorder %v1003, %v422
        %vm1151 = vcmp.eq.s32.totalorder %v1003, %v423
        %vm1152 = vcmp.eq.s32.totalorder %v1006, %v422
        %vm1153 = vcmp.eq.s32.totalorder %v1006, %v423
        %vm1154 = vcmp.eq.s32.totalorder %v1009, %v422
        %vm1155 = vcmp.eq.s32.totalorder %v1009, %v423
        %vm1156 = vcmp.eq.s32.totalorder %v1012, %v422
        %vm1157 = vcmp.eq.s32.totalorder %v1012, %v423
        %vm1158 = vcmp.eq.s32.totalorder %v1015, %v422
        %vm1159 = vcmp.eq.s32.totalorder %v1015, %v423
        %vm1160 = vcmp.eq.s32.totalorder %v1018, %v422
        %vm1161 = vcmp.eq.s32.totalorder %v1018, %v423
        %vm1162 = vcmp.eq.s32.totalorder %v1021, %v422
        %vm1163 = vcmp.eq.s32.totalorder %v1021, %v423
        %vm1164 = vcmp.eq.s32.totalorder %v1024, %v422
        %vm1165 = vcmp.eq.s32.totalorder %v1024, %v423
        %vm1166 = vcmp.eq.s32.totalorder %v1027, %v422
        %vm1167 = vcmp.eq.s32.totalorder %v1027, %v423
        %vm1168 = vcmp.eq.s32.totalorder %v1030, %v422
        %vm1169 = vcmp.eq.s32.totalorder %v1030, %v423
        %vm1170 = vcmp.eq.s32.totalorder %v1033, %v422
        %vm1171 = vcmp.eq.s32.totalorder %v1033, %v423
        %vm1172 = vcmp.eq.s32.totalorder %v1036, %v422
        %vm1173 = vcmp.eq.s32.totalorder %v1036, %v423
        %vm1174 = vcmp.eq.s32.totalorder %v1039, %v422
        %vm1175 = vcmp.eq.s32.totalorder %v1039, %v423
        %vm1176 = vcmp.eq.s32.totalorder %v1042, %v422
        %vm1177 = vcmp.eq.s32.totalorder %v1042, %v423
        %vm1178 = vcmp.eq.s32.totalorder %v1045, %v422
        %vm1179 = vcmp.eq.s32.totalorder %v1045, %v423
        %vm1180 = vcmp.eq.s32.totalorder %v1048, %v422
        %vm1181 = vcmp.eq.s32.totalorder %v1048, %v423
        %vm1182 = vcmp.eq.s32.totalorder %v1051, %v422
        %vm1183 = vcmp.eq.s32.totalorder %v1051, %v423
        %vm1184 = vcmp.eq.s32.totalorder %v1054, %v422
        %vm1185 = vcmp.eq.s32.totalorder %v1054, %v423
        %vm1186 = vcmp.eq.s32.totalorder %v1057, %v422
        %vm1187 = vcmp.eq.s32.totalorder %v1057, %v423
        %vm1188 = vcmp.eq.s32.totalorder %v1060, %v422
        %vm1189 = vcmp.eq.s32.totalorder %v1060, %v423
        %vm1190 = vcmp.eq.s32.totalorder %v1063, %v422
        %vm1191 = vcmp.eq.s32.totalorder %v1063, %v423
        %v1192 = vsel %vm1064, 1, 0
        %v1193 = vsel %vm1065, 1, 0
        %v1194 = vsel %vm1066, 1, 0
        %v1195 = vsel %vm1067, 1, 0
        %v1196 = vsel %vm1068, 1, 0
        %v1197 = vsel %vm1069, 1, 0
        %v1198 = vsel %vm1070, 1, 0
        %v1199 = vsel %vm1071, 1, 0
        %v1200 = vsel %vm1072, 1, 0
        %v1201 = vsel %vm1073, 1, 0
        %v1202 = vsel %vm1074, 1, 0
        %v1203 = vsel %vm1075, 1, 0
        %v1204 = vsel %vm1076, 1, 0
        %v1205 = vsel %vm1077, 1, 0
        %v1206 = vsel %vm1078, 1, 0
        %v1207 = vsel %vm1079, 1, 0
        %v1208 = vsel %vm1080, 1, 0
        %v1209 = vsel %vm1081, 1, 0
        %v1210 = vsel %vm1082, 1, 0
        %v1211 = vsel %vm1083, 1, 0
        %v1212 = vsel %vm1084, 1, 0
        %v1213 = vsel %vm1085, 1, 0
        %v1214 = vsel %vm1086, 1, 0
        %v1215 = vsel %vm1087, 1, 0
        %v1216 = vsel %vm1088, 1, 0
        %v1217 = vsel %vm1089, 1, 0
        %v1218 = vsel %vm1090, 1, 0
        %v1219 = vsel %vm1091, 1, 0
        %v1220 = vsel %vm1092, 1, 0
        %v1221 = vsel %vm1093, 1, 0
        %v1222 = vsel %vm1094, 1, 0
        %v1223 = vsel %vm1095, 1, 0
        %v1224 = vsel %vm1096, 1, 0
        %v1225 = vsel %vm1097, 1, 0
        %v1226 = vsel %vm1098, 1, 0
        %v1227 = vsel %vm1099, 1, 0
        %v1228 = vsel %vm1100, 1, 0
        %v1229 = vsel %vm1101, 1, 0
        %v1230 = vsel %vm1102, 1, 0
        %v1231 = vsel %vm1103, 1, 0
        %v1232 = vsel %vm1104, 1, 0
        %v1233 = vsel %vm1105, 1, 0
        %v1234 = vsel %vm1106, 1, 0
        %v1235 = vsel %vm1107, 1, 0
        %v1236 = vsel %vm1108, 1, 0
        %v1237 = vsel %vm1109, 1, 0
        %v1238 = vsel %vm1110, 1, 0
        %v1239 = vsel %vm1111, 1, 0
        %v1240 = vsel %vm1112, 1, 0
        %v1241 = vsel %vm1113, 1, 0
        %v1242 = vsel %vm1114, 1, 0
        %v1243 = vsel %vm1115, 1, 0
        %v1244 = vsel %vm1116, 1, 0
        %v1245 = vsel %vm1117, 1, 0
        %v1246 = vsel %vm1118, 1, 0
        %v1247 = vsel %vm1119, 1, 0
        %v1248 = vsel %vm1120, 1, 0
        %v1249 = vsel %vm1121, 1, 0
        %v1250 = vsel %vm1122, 1, 0
        %v1251 = vsel %vm1123, 1, 0
        %v1252 = vsel %vm1124, 1, 0
        %v1253 = vsel %vm1125, 1, 0
        %v1254 = vsel %vm1126, 1, 0
        %v1255 = vsel %vm1127, 1, 0
        %v1256 = vsel %vm1128, 1, 0
        %v1257 = vsel %vm1129, 1, 0
        %v1258 = vsel %vm1130, 1, 0
        %v1259 = vsel %vm1131, 1, 0
        %v1260 = vsel %vm1132, 1, 0
        %v1261 = vsel %vm1133, 1, 0
        %v1262 = vsel %vm1134, 1, 0
        %v1263 = vsel %vm1135, 1, 0
        %v1264 = vsel %vm1136, 1, 0
        %v1265 = vsel %vm1137, 1, 0
        %v1266 = vsel %vm1138, 1, 0
        %v1267 = vsel %vm1139, 1, 0
        %v1268 = vsel %vm1140, 1, 0
        %v1269 = vsel %vm1141, 1, 0
        %v1270 = vsel %vm1142, 1, 0
        %v1271 = vsel %vm1143, 1, 0
        %v1272 = vsel %vm1144, 1, 0
        %v1273 = vsel %vm1145, 1, 0
        %v1274 = vsel %vm1146, 1, 0
        %v1275 = vsel %vm1147, 1, 0
        %v1276 = vsel %vm1148, 1, 0
        %v1277 = vsel %vm1149, 1, 0
        %v1278 = vsel %vm1150, 1, 0
        %v1279 = vsel %vm1151, 1, 0
        %v1280 = vsel %vm1152, 1, 0
        %v1281 = vsel %vm1153, 1, 0
        %v1282 = vsel %vm1154, 1, 0
        %v1283 = vsel %vm1155, 1, 0
        %v1284 = vsel %vm1156, 1, 0
        %v1285 = vsel %vm1157, 1, 0
        %v1286 = vsel %vm1158, 1, 0
        %v1287 = vsel %vm1159, 1, 0
        %v1288 = vsel %vm1160, 1, 0
        %v1289 = vsel %vm1161, 1, 0
        %v1290 = vsel %vm1162, 1, 0
        %v1291 = vsel %vm1163, 1, 0
        %v1292 = vsel %vm1164, 1, 0
        %v1293 = vsel %vm1165, 1, 0
        %v1294 = vsel %vm1166, 1, 0
        %v1295 = vsel %vm1167, 1, 0
        %v1296 = vsel %vm1168, 1, 0
        %v1297 = vsel %vm1169, 1, 0
        %v1298 = vsel %vm1170, 1, 0
        %v1299 = vsel %vm1171, 1, 0
        %v1300 = vsel %vm1172, 1, 0
        %v1301 = vsel %vm1173, 1, 0
        %v1302 = vsel %vm1174, 1, 0
        %v1303 = vsel %vm1175, 1, 0
        %v1304 = vsel %vm1176, 1, 0
        %v1305 = vsel %vm1177, 1, 0
        %v1306 = vsel %vm1178, 1, 0
        %v1307 = vsel %vm1179, 1, 0
        %v1308 = vsel %vm1180, 1, 0
        %v1309 = vsel %vm1181, 1, 0
        %v1310 = vsel %vm1182, 1, 0
        %v1311 = vsel %vm1183, 1, 0
        %v1312 = vsel %vm1184, 1, 0
        %v1313 = vsel %vm1185, 1, 0
        %v1314 = vsel %vm1186, 1, 0
        %v1315 = vsel %vm1187, 1, 0
        %v1316 = vsel %vm1188, 1, 0
        %v1317 = vsel %vm1189, 1, 0
        %v1318 = vsel %vm1190, 1, 0
        %v1319 = vsel %vm1191, 1, 0
        %v1320 = vadd.s32 %v744, %v1192
        %v1321 = vadd.s32 %v745, %v1193
        %v1322 = vadd.s32 %v746, %v1194
        %v1323 = vadd.s32 %v747, %v1195
        %v1324 = vadd.s32 %v748, %v1196
        %v1325 = vadd.s32 %v749, %v1197
        %v1326 = vadd.s32 %v750, %v1198
        %v1327 = vadd.s32 %v751, %v1199
        %v1328 = vadd.s32 %v752, %v1200
        %v1329 = vadd.s32 %v753, %v1201
        %v1330 = vadd.s32 %v754, %v1202
        %v1331 = vadd.s32 %v755, %v1203
        %v1332 = vadd.s32 %v756, %v1204
        %v1333 = vadd.s32 %v757, %v1205
        %v1334 = vadd.s32 %v758, %v1206
        %v1335 = vadd.s32 %v759, %v1207
        %v1336 = vadd.s32 %v760, %v1208
        %v1337 = vadd.s32 %v761, %v1209
        %v1338 = vadd.s32 %v762, %v1210
        %v1339 = vadd.s32 %v763, %v1211
        %v1340 = vadd.s32 %v764, %v1212
        %v1341 = vadd.s32 %v765, %v1213
        %v1342 = vadd.s32 %v766, %v1214
        %v1343 = vadd.s32 %v767, %v1215
        %v1344 = vadd.s32 %v768, %v1216
        %v1345 = vadd.s32 %v769, %v1217
        %v1346 = vadd.s32 %v770, %v1218
        %v1347 = vadd.s32 %v771, %v1219
        %v1348 = vadd.s32 %v772, %v1220
        %v1349 = vadd.s32 %v773, %v1221
        %v1350 = vadd.s32 %v774, %v1222
        %v1351 = vadd.s32 %v775, %v1223
        %v1352 = vadd.s32 %v776, %v1224
        %v1353 = vadd.s32 %v777, %v1225
        %v1354 = vadd.s32 %v778, %v1226
        %v1355 = vadd.s32 %v779, %v1227
        %v1356 = vadd.s32 %v780, %v1228
        %v1357 = vadd.s32 %v781, %v1229
        %v1358 = vadd.s32 %v782, %v1230
        %v1359 = vadd.s32 %v783, %v1231
        %v1360 = vadd.s32 %v784, %v1232
        %v1361 = vadd.s32 %v785, %v1233
        %v1362 = vadd.s32 %v786, %v1234
        %v1363 = vadd.s32 %v787, %v1235
        %v1364 = vadd.s32 %v788, %v1236
        %v1365 = vadd.s32 %v789, %v1237
        %v1366 = vadd.s32 %v790, %v1238
        %v1367 = vadd.s32 %v791, %v1239
        %v1368 = vadd.s32 %v792, %v1240
        %v1369 = vadd.s32 %v793, %v1241
        %v1370 = vadd.s32 %v794, %v1242
        %v1371 = vadd.s32 %v795, %v1243
        %v1372 = vadd.s32 %v796, %v1244
        %v1373 = vadd.s32 %v797, %v1245
        %v1374 = vadd.s32 %v798, %v1246
        %v1375 = vadd.s32 %v799, %v1247
        %v1376 = vadd.s32 %v800, %v1248
        %v1377 = vadd.s32 %v801, %v1249
        %v1378 = vadd.s32 %v802, %v1250
        %v1379 = vadd.s32 %v803, %v1251
        %v1380 = vadd.s32 %v804, %v1252
        %v1381 = vadd.s32 %v805, %v1253
        %v1382 = vadd.s32 %v806, %v1254
        %v1383 = vadd.s32 %v807, %v1255
        %v1384 = vadd.s32 %v808, %v1256
        %v1385 = vadd.s32 %v809, %v1257
        %v1386 = vadd.s32 %v810, %v1258
        %v1387 = vadd.s32 %v811, %v1259
        %v1388 = vadd.s32 %v812, %v1260
        %v1389 = vadd.s32 %v813, %v1261
        %v1390 = vadd.s32 %v814, %v1262
        %v1391 = vadd.s32 %v815, %v1263
        %v1392 = vadd.s32 %v816, %v1264
        %v1393 = vadd.s32 %v817, %v1265
        %v1394 = vadd.s32 %v818, %v1266
        %v1395 = vadd.s32 %v819, %v1267
        %v1396 = vadd.s32 %v820, %v1268
        %v1397 = vadd.s32 %v821, %v1269
        %v1398 = vadd.s32 %v822, %v1270
        %v1399 = vadd.s32 %v823, %v1271
        %v1400 = vadd.s32 %v824, %v1272
        %v1401 = vadd.s32 %v825, %v1273
        %v1402 = vadd.s32 %v826, %v1274
        %v1403 = vadd.s32 %v827, %v1275
        %v1404 = vadd.s32 %v828, %v1276
        %v1405 = vadd.s32 %v829, %v1277
        %v1406 = vadd.s32 %v830, %v1278
        %v1407 = vadd.s32 %v831, %v1279
        %v1408 = vadd.s32 %v832, %v1280
        %v1409 = vadd.s32 %v833, %v1281
        %v1410 = vadd.s32 %v834, %v1282
        %v1411 = vadd.s32 %v835, %v1283
        %v1412 = vadd.s32 %v836, %v1284
        %v1413 = vadd.s32 %v837, %v1285
        %v1414 = vadd.s32 %v838, %v1286
        %v1415 = vadd.s32 %v839, %v1287
        %v1416 = vadd.s32 %v840, %v1288
        %v1417 = vadd.s32 %v841, %v1289
        %v1418 = vadd.s32 %v842, %v1290
        %v1419 = vadd.s32 %v843, %v1291
        %v1420 = vadd.s32 %v844, %v1292
        %v1421 = vadd.s32 %v845, %v1293
        %v1422 = vadd.s32 %v846, %v1294
        %v1423 = vadd.s32 %v847, %v1295
        %v1424 = vadd.s32 %v848, %v1296
        %v1425 = vadd.s32 %v849, %v1297
        %v1426 = vadd.s32 %v850, %v1298
        %v1427 = vadd.s32 %v851, %v1299
        %v1428 = vadd.s32 %v852, %v1300
        %v1429 = vadd.s32 %v853, %v1301
        %v1430 = vadd.s32 %v854, %v1302
        %v1431 = vadd.s32 %v855, %v1303
        %v1432 = vadd.s32 %v856, %v1304
        %v1433 = vadd.s32 %v857, %v1305
        %v1434 = vadd.s32 %v858, %v1306
        %v1435 = vadd.s32 %v859, %v1307
        %v1436 = vadd.s32 %v860, %v1308
        %v1437 = vadd.s32 %v861, %v1309
        %v1438 = vadd.s32 %v862, %v1310
        %v1439 = vadd.s32 %v863, %v1311
        %v1440 = vadd.s32 %v864, %v1312
        %v1441 = vadd.s32 %v865, %v1313
        %v1442 = vadd.s32 %v866, %v1314
        %v1443 = vadd.s32 %v867, %v1315
        %v1444 = vadd.s32 %v868, %v1316
        %v1445 = vadd.s32 %v869, %v1317
        %v1446 = vadd.s32 %v870, %v1318
        %v1447 = vadd.s32 %v871, %v1319
        %1448 = vset.pattern.permute.xlu0 2
        %1449 = vperm.xlu0 %1448, %v357
        %v1450 = vpop.permute.xlu0 %1449
        %1451 = vset.pattern.permute.xlu0 2
        %1452 = vperm.xlu0 %1451, %v358
        %v1453 = vpop.permute.xlu0 %1452
        %1454 = vset.pattern.permute.xlu0 2
        %1455 = vperm.xlu0 %1454, %v359
        %v1456 = vpop.permute.xlu0 %1455
        %1457 = vset.pattern.permute.xlu0 2
        %1458 = vperm.xlu0 %1457, %v360
        %v1459 = vpop.permute.xlu0 %1458
        %1460 = vset.pattern.permute.xlu0 2
        %1461 = vperm.xlu0 %1460, %v361
        %v1462 = vpop.permute.xlu0 %1461
        %1463 = vset.pattern.permute.xlu0 2
        %1464 = vperm.xlu0 %1463, %v362
        %v1465 = vpop.permute.xlu0 %1464
        %1466 = vset.pattern.permute.xlu0 2
        %1467 = vperm.xlu0 %1466, %v363
        %v1468 = vpop.permute.xlu0 %1467
        %1469 = vset.pattern.permute.xlu0 2
        %1470 = vperm.xlu0 %1469, %v364
        %v1471 = vpop.permute.xlu0 %1470
        %1472 = vset.pattern.permute.xlu0 2
        %1473 = vperm.xlu0 %1472, %v365
        %v1474 = vpop.permute.xlu0 %1473
        %1475 = vset.pattern.permute.xlu0 2
        %1476 = vperm.xlu0 %1475, %v366
        %v1477 = vpop.permute.xlu0 %1476
        %1478 = vset.pattern.permute.xlu0 2
        %1479 = vperm.xlu0 %1478, %v367
        %v1480 = vpop.permute.xlu0 %1479
        %1481 = vset.pattern.permute.xlu0 2
        %1482 = vperm.xlu0 %1481, %v368
        %v1483 = vpop.permute.xlu0 %1482
        %1484 = vset.pattern.permute.xlu0 2
        %1485 = vperm.xlu0 %1484, %v369
        %v1486 = vpop.permute.xlu0 %1485
        %1487 = vset.pattern.permute.xlu0 2
        %1488 = vperm.xlu0 %1487, %v370
        %v1489 = vpop.permute.xlu0 %1488
        %1490 = vset.pattern.permute.xlu0 2
        %1491 = vperm.xlu0 %1490, %v371
        %v1492 = vpop.permute.xlu0 %1491
        %1493 = vset.pattern.permute.xlu0 2
        %1494 = vperm.xlu0 %1493, %v372
        %v1495 = vpop.permute.xlu0 %1494
        %1496 = vset.pattern.permute.xlu0 2
        %1497 = vperm.xlu0 %1496, %v373
        %v1498 = vpop.permute.xlu0 %1497
        %1499 = vset.pattern.permute.xlu0 2
        %1500 = vperm.xlu0 %1499, %v374
        %v1501 = vpop.permute.xlu0 %1500
        %1502 = vset.pattern.permute.xlu0 2
        %1503 = vperm.xlu0 %1502, %v375
        %v1504 = vpop.permute.xlu0 %1503
        %1505 = vset.pattern.permute.xlu0 2
        %1506 = vperm.xlu0 %1505, %v376
        %v1507 = vpop.permute.xlu0 %1506
        %1508 = vset.pattern.permute.xlu0 2
        %1509 = vperm.xlu0 %1508, %v377
        %v1510 = vpop.permute.xlu0 %1509
        %1511 = vset.pattern.permute.xlu0 2
        %1512 = vperm.xlu0 %1511, %v378
        %v1513 = vpop.permute.xlu0 %1512
        %1514 = vset.pattern.permute.xlu0 2
        %1515 = vperm.xlu0 %1514, %v379
        %v1516 = vpop.permute.xlu0 %1515
        %1517 = vset.pattern.permute.xlu0 2
        %1518 = vperm.xlu0 %1517, %v380
        %v1519 = vpop.permute.xlu0 %1518
        %1520 = vset.pattern.permute.xlu0 2
        %1521 = vperm.xlu0 %1520, %v381
        %v1522 = vpop.permute.xlu0 %1521
        %1523 = vset.pattern.permute.xlu0 2
        %1524 = vperm.xlu0 %1523, %v382
        %v1525 = vpop.permute.xlu0 %1524
        %1526 = vset.pattern.permute.xlu0 2
        %1527 = vperm.xlu0 %1526, %v383
        %v1528 = vpop.permute.xlu0 %1527
        %1529 = vset.pattern.permute.xlu0 2
        %1530 = vperm.xlu0 %1529, %v384
        %v1531 = vpop.permute.xlu0 %1530
        %1532 = vset.pattern.permute.xlu0 2
        %1533 = vperm.xlu0 %1532, %v385
        %v1534 = vpop.permute.xlu0 %1533
        %1535 = vset.pattern.permute.xlu0 2
        %1536 = vperm.xlu0 %1535, %v386
        %v1537 = vpop.permute.xlu0 %1536
        %1538 = vset.pattern.permute.xlu0 2
        %1539 = vperm.xlu0 %1538, %v387
        %v1540 = vpop.permute.xlu0 %1539
        %1541 = vset.pattern.permute.xlu0 2
        %1542 = vperm.xlu0 %1541, %v388
        %v1543 = vpop.permute.xlu0 %1542
        %1544 = vset.pattern.permute.xlu0 2
        %1545 = vperm.xlu0 %1544, %v389
        %v1546 = vpop.permute.xlu0 %1545
        %1547 = vset.pattern.permute.xlu0 2
        %1548 = vperm.xlu0 %1547, %v390
        %v1549 = vpop.permute.xlu0 %1548
        %1550 = vset.pattern.permute.xlu0 2
        %1551 = vperm.xlu0 %1550, %v391
        %v1552 = vpop.permute.xlu0 %1551
        %1553 = vset.pattern.permute.xlu0 2
        %1554 = vperm.xlu0 %1553, %v392
        %v1555 = vpop.permute.xlu0 %1554
        %1556 = vset.pattern.permute.xlu0 2
        %1557 = vperm.xlu0 %1556, %v393
        %v1558 = vpop.permute.xlu0 %1557
        %1559 = vset.pattern.permute.xlu0 2
        %1560 = vperm.xlu0 %1559, %v394
        %v1561 = vpop.permute.xlu0 %1560
        %1562 = vset.pattern.permute.xlu0 2
        %1563 = vperm.xlu0 %1562, %v395
        %v1564 = vpop.permute.xlu0 %1563
        %1565 = vset.pattern.permute.xlu0 2
        %1566 = vperm.xlu0 %1565, %v396
        %v1567 = vpop.permute.xlu0 %1566
        %1568 = vset.pattern.permute.xlu0 2
        %1569 = vperm.xlu0 %1568, %v397
        %v1570 = vpop.permute.xlu0 %1569
        %1571 = vset.pattern.permute.xlu0 2
        %1572 = vperm.xlu0 %1571, %v398
        %v1573 = vpop.permute.xlu0 %1572
        %1574 = vset.pattern.permute.xlu0 2
        %1575 = vperm.xlu0 %1574, %v399
        %v1576 = vpop.permute.xlu0 %1575
        %1577 = vset.pattern.permute.xlu0 2
        %1578 = vperm.xlu0 %1577, %v400
        %v1579 = vpop.permute.xlu0 %1578
        %1580 = vset.pattern.permute.xlu0 2
        %1581 = vperm.xlu0 %1580, %v401
        %v1582 = vpop.permute.xlu0 %1581
        %1583 = vset.pattern.permute.xlu0 2
        %1584 = vperm.xlu0 %1583, %v402
        %v1585 = vpop.permute.xlu0 %1584
        %1586 = vset.pattern.permute.xlu0 2
        %1587 = vperm.xlu0 %1586, %v403
        %v1588 = vpop.permute.xlu0 %1587
        %1589 = vset.pattern.permute.xlu0 2
        %1590 = vperm.xlu0 %1589, %v404
        %v1591 = vpop.permute.xlu0 %1590
        %1592 = vset.pattern.permute.xlu0 2
        %1593 = vperm.xlu0 %1592, %v405
        %v1594 = vpop.permute.xlu0 %1593
        %1595 = vset.pattern.permute.xlu0 2
        %1596 = vperm.xlu0 %1595, %v406
        %v1597 = vpop.permute.xlu0 %1596
        %1598 = vset.pattern.permute.xlu0 2
        %1599 = vperm.xlu0 %1598, %v407
        %v1600 = vpop.permute.xlu0 %1599
        %1601 = vset.pattern.permute.xlu0 2
        %1602 = vperm.xlu0 %1601, %v408
        %v1603 = vpop.permute.xlu0 %1602
        %1604 = vset.pattern.permute.xlu0 2
        %1605 = vperm.xlu0 %1604, %v409
        %v1606 = vpop.permute.xlu0 %1605
        %1607 = vset.pattern.permute.xlu0 2
        %1608 = vperm.xlu0 %1607, %v410
        %v1609 = vpop.permute.xlu0 %1608
        %1610 = vset.pattern.permute.xlu0 2
        %1611 = vperm.xlu0 %1610, %v411
        %v1612 = vpop.permute.xlu0 %1611
        %1613 = vset.pattern.permute.xlu0 2
        %1614 = vperm.xlu0 %1613, %v412
        %v1615 = vpop.permute.xlu0 %1614
        %1616 = vset.pattern.permute.xlu0 2
        %1617 = vperm.xlu0 %1616, %v413
        %v1618 = vpop.permute.xlu0 %1617
        %1619 = vset.pattern.permute.xlu0 2
        %1620 = vperm.xlu0 %1619, %v414
        %v1621 = vpop.permute.xlu0 %1620
        %1622 = vset.pattern.permute.xlu0 2
        %1623 = vperm.xlu0 %1622, %v415
        %v1624 = vpop.permute.xlu0 %1623
        %1625 = vset.pattern.permute.xlu0 2
        %1626 = vperm.xlu0 %1625, %v416
        %v1627 = vpop.permute.xlu0 %1626
        %1628 = vset.pattern.permute.xlu0 2
        %1629 = vperm.xlu0 %1628, %v417
        %v1630 = vpop.permute.xlu0 %1629
        %1631 = vset.pattern.permute.xlu0 2
        %1632 = vperm.xlu0 %1631, %v418
        %v1633 = vpop.permute.xlu0 %1632
        %1634 = vset.pattern.permute.xlu0 2
        %1635 = vperm.xlu0 %1634, %v419
        %v1636 = vpop.permute.xlu0 %1635
        %1637 = vset.pattern.permute.xlu0 2
        %1638 = vperm.xlu0 %1637, %v420
        %v1639 = vpop.permute.xlu0 %1638
        %vm1640 = vcmp.eq.s32.totalorder %v1450, %v422
        %vm1641 = vcmp.eq.s32.totalorder %v1450, %v423
        %vm1642 = vcmp.eq.s32.totalorder %v1453, %v422
        %vm1643 = vcmp.eq.s32.totalorder %v1453, %v423
        %vm1644 = vcmp.eq.s32.totalorder %v1456, %v422
        %vm1645 = vcmp.eq.s32.totalorder %v1456, %v423
        %vm1646 = vcmp.eq.s32.totalorder %v1459, %v422
        %vm1647 = vcmp.eq.s32.totalorder %v1459, %v423
        %vm1648 = vcmp.eq.s32.totalorder %v1462, %v422
        %vm1649 = vcmp.eq.s32.totalorder %v1462, %v423
        %vm1650 = vcmp.eq.s32.totalorder %v1465, %v422
        %vm1651 = vcmp.eq.s32.totalorder %v1465, %v423
        %vm1652 = vcmp.eq.s32.totalorder %v1468, %v422
        %vm1653 = vcmp.eq.s32.totalorder %v1468, %v423
        %vm1654 = vcmp.eq.s32.totalorder %v1471, %v422
        %vm1655 = vcmp.eq.s32.totalorder %v1471, %v423
        %vm1656 = vcmp.eq.s32.totalorder %v1474, %v422
        %vm1657 = vcmp.eq.s32.totalorder %v1474, %v423
        %vm1658 = vcmp.eq.s32.totalorder %v1477, %v422
        %vm1659 = vcmp.eq.s32.totalorder %v1477, %v423
        %vm1660 = vcmp.eq.s32.totalorder %v1480, %v422
        %vm1661 = vcmp.eq.s32.totalorder %v1480, %v423
        %vm1662 = vcmp.eq.s32.totalorder %v1483, %v422
        %vm1663 = vcmp.eq.s32.totalorder %v1483, %v423
        %vm1664 = vcmp.eq.s32.totalorder %v1486, %v422
        %vm1665 = vcmp.eq.s32.totalorder %v1486, %v423
        %vm1666 = vcmp.eq.s32.totalorder %v1489, %v422
        %vm1667 = vcmp.eq.s32.totalorder %v1489, %v423
        %vm1668 = vcmp.eq.s32.totalorder %v1492, %v422
        %vm1669 = vcmp.eq.s32.totalorder %v1492, %v423
        %vm1670 = vcmp.eq.s32.totalorder %v1495, %v422
        %vm1671 = vcmp.eq.s32.totalorder %v1495, %v423
        %vm1672 = vcmp.eq.s32.totalorder %v1498, %v422
        %vm1673 = vcmp.eq.s32.totalorder %v1498, %v423
        %vm1674 = vcmp.eq.s32.totalorder %v1501, %v422
        %vm1675 = vcmp.eq.s32.totalorder %v1501, %v423
        %vm1676 = vcmp.eq.s32.totalorder %v1504, %v422
        %vm1677 = vcmp.eq.s32.totalorder %v1504, %v423
        %vm1678 = vcmp.eq.s32.totalorder %v1507, %v422
        %vm1679 = vcmp.eq.s32.totalorder %v1507, %v423
        %vm1680 = vcmp.eq.s32.totalorder %v1510, %v422
        %vm1681 = vcmp.eq.s32.totalorder %v1510, %v423
        %vm1682 = vcmp.eq.s32.totalorder %v1513, %v422
        %vm1683 = vcmp.eq.s32.totalorder %v1513, %v423
        %vm1684 = vcmp.eq.s32.totalorder %v1516, %v422
        %vm1685 = vcmp.eq.s32.totalorder %v1516, %v423
        %vm1686 = vcmp.eq.s32.totalorder %v1519, %v422
        %vm1687 = vcmp.eq.s32.totalorder %v1519, %v423
        %vm1688 = vcmp.eq.s32.totalorder %v1522, %v422
        %vm1689 = vcmp.eq.s32.totalorder %v1522, %v423
        %vm1690 = vcmp.eq.s32.totalorder %v1525, %v422
        %vm1691 = vcmp.eq.s32.totalorder %v1525, %v423
        %vm1692 = vcmp.eq.s32.totalorder %v1528, %v422
        %vm1693 = vcmp.eq.s32.totalorder %v1528, %v423
        %vm1694 = vcmp.eq.s32.totalorder %v1531, %v422
        %vm1695 = vcmp.eq.s32.totalorder %v1531, %v423
        %vm1696 = vcmp.eq.s32.totalorder %v1534, %v422
        %vm1697 = vcmp.eq.s32.totalorder %v1534, %v423
        %vm1698 = vcmp.eq.s32.totalorder %v1537, %v422
        %vm1699 = vcmp.eq.s32.totalorder %v1537, %v423
        %vm1700 = vcmp.eq.s32.totalorder %v1540, %v422
        %vm1701 = vcmp.eq.s32.totalorder %v1540, %v423
        %vm1702 = vcmp.eq.s32.totalorder %v1543, %v422
        %vm1703 = vcmp.eq.s32.totalorder %v1543, %v423
        %vm1704 = vcmp.eq.s32.totalorder %v1546, %v422
        %vm1705 = vcmp.eq.s32.totalorder %v1546, %v423
        %vm1706 = vcmp.eq.s32.totalorder %v1549, %v422
        %vm1707 = vcmp.eq.s32.totalorder %v1549, %v423
        %vm1708 = vcmp.eq.s32.totalorder %v1552, %v422
        %vm1709 = vcmp.eq.s32.totalorder %v1552, %v423
        %vm1710 = vcmp.eq.s32.totalorder %v1555, %v422
        %vm1711 = vcmp.eq.s32.totalorder %v1555, %v423
        %vm1712 = vcmp.eq.s32.totalorder %v1558, %v422
        %vm1713 = vcmp.eq.s32.totalorder %v1558, %v423
        %vm1714 = vcmp.eq.s32.totalorder %v1561, %v422
        %vm1715 = vcmp.eq.s32.totalorder %v1561, %v423
        %vm1716 = vcmp.eq.s32.totalorder %v1564, %v422
        %vm1717 = vcmp.eq.s32.totalorder %v1564, %v423
        %vm1718 = vcmp.eq.s32.totalorder %v1567, %v422
        %vm1719 = vcmp.eq.s32.totalorder %v1567, %v423
        %vm1720 = vcmp.eq.s32.totalorder %v1570, %v422
        %vm1721 = vcmp.eq.s32.totalorder %v1570, %v423
        %vm1722 = vcmp.eq.s32.totalorder %v1573, %v422
        %vm1723 = vcmp.eq.s32.totalorder %v1573, %v423
        %vm1724 = vcmp.eq.s32.totalorder %v1576, %v422
        %vm1725 = vcmp.eq.s32.totalorder %v1576, %v423
        %vm1726 = vcmp.eq.s32.totalorder %v1579, %v422
        %vm1727 = vcmp.eq.s32.totalorder %v1579, %v423
        %vm1728 = vcmp.eq.s32.totalorder %v1582, %v422
        %vm1729 = vcmp.eq.s32.totalorder %v1582, %v423
        %vm1730 = vcmp.eq.s32.totalorder %v1585, %v422
        %vm1731 = vcmp.eq.s32.totalorder %v1585, %v423
        %vm1732 = vcmp.eq.s32.totalorder %v1588, %v422
        %vm1733 = vcmp.eq.s32.totalorder %v1588, %v423
        %vm1734 = vcmp.eq.s32.totalorder %v1591, %v422
        %vm1735 = vcmp.eq.s32.totalorder %v1591, %v423
        %vm1736 = vcmp.eq.s32.totalorder %v1594, %v422
        %vm1737 = vcmp.eq.s32.totalorder %v1594, %v423
        %vm1738 = vcmp.eq.s32.totalorder %v1597, %v422
        %vm1739 = vcmp.eq.s32.totalorder %v1597, %v423
        %vm1740 = vcmp.eq.s32.totalorder %v1600, %v422
        %vm1741 = vcmp.eq.s32.totalorder %v1600, %v423
        %vm1742 = vcmp.eq.s32.totalorder %v1603, %v422
        %vm1743 = vcmp.eq.s32.totalorder %v1603, %v423
        %vm1744 = vcmp.eq.s32.totalorder %v1606, %v422
        %vm1745 = vcmp.eq.s32.totalorder %v1606, %v423
        %vm1746 = vcmp.eq.s32.totalorder %v1609, %v422
        %vm1747 = vcmp.eq.s32.totalorder %v1609, %v423
        %vm1748 = vcmp.eq.s32.totalorder %v1612, %v422
        %vm1749 = vcmp.eq.s32.totalorder %v1612, %v423
        %vm1750 = vcmp.eq.s32.totalorder %v1615, %v422
        %vm1751 = vcmp.eq.s32.totalorder %v1615, %v423
        %vm1752 = vcmp.eq.s32.totalorder %v1618, %v422
        %vm1753 = vcmp.eq.s32.totalorder %v1618, %v423
        %vm1754 = vcmp.eq.s32.totalorder %v1621, %v422
        %vm1755 = vcmp.eq.s32.totalorder %v1621, %v423
        %vm1756 = vcmp.eq.s32.totalorder %v1624, %v422
        %vm1757 = vcmp.eq.s32.totalorder %v1624, %v423
        %vm1758 = vcmp.eq.s32.totalorder %v1627, %v422
        %vm1759 = vcmp.eq.s32.totalorder %v1627, %v423
        %vm1760 = vcmp.eq.s32.totalorder %v1630, %v422
        %vm1761 = vcmp.eq.s32.totalorder %v1630, %v423
        %vm1762 = vcmp.eq.s32.totalorder %v1633, %v422
        %vm1763 = vcmp.eq.s32.totalorder %v1633, %v423
        %vm1764 = vcmp.eq.s32.totalorder %v1636, %v422
        %vm1765 = vcmp.eq.s32.totalorder %v1636, %v423
        %vm1766 = vcmp.eq.s32.totalorder %v1639, %v422
        %vm1767 = vcmp.eq.s32.totalorder %v1639, %v423
        %v1768 = vsel %vm1640, 1, 0
        %v1769 = vsel %vm1641, 1, 0
        %v1770 = vsel %vm1642, 1, 0
        %v1771 = vsel %vm1643, 1, 0
        %v1772 = vsel %vm1644, 1, 0
        %v1773 = vsel %vm1645, 1, 0
        %v1774 = vsel %vm1646, 1, 0
        %v1775 = vsel %vm1647, 1, 0
        %v1776 = vsel %vm1648, 1, 0
        %v1777 = vsel %vm1649, 1, 0
        %v1778 = vsel %vm1650, 1, 0
        %v1779 = vsel %vm1651, 1, 0
        %v1780 = vsel %vm1652, 1, 0
        %v1781 = vsel %vm1653, 1, 0
        %v1782 = vsel %vm1654, 1, 0
        %v1783 = vsel %vm1655, 1, 0
        %v1784 = vsel %vm1656, 1, 0
        %v1785 = vsel %vm1657, 1, 0
        %v1786 = vsel %vm1658, 1, 0
        %v1787 = vsel %vm1659, 1, 0
        %v1788 = vsel %vm1660, 1, 0
        %v1789 = vsel %vm1661, 1, 0
        %v1790 = vsel %vm1662, 1, 0
        %v1791 = vsel %vm1663, 1, 0
        %v1792 = vsel %vm1664, 1, 0
        %v1793 = vsel %vm1665, 1, 0
        %v1794 = vsel %vm1666, 1, 0
        %v1795 = vsel %vm1667, 1, 0
        %v1796 = vsel %vm1668, 1, 0
        %v1797 = vsel %vm1669, 1, 0
        %v1798 = vsel %vm1670, 1, 0
        %v1799 = vsel %vm1671, 1, 0
        %v1800 = vsel %vm1672, 1, 0
        %v1801 = vsel %vm1673, 1, 0
        %v1802 = vsel %vm1674, 1, 0
        %v1803 = vsel %vm1675, 1, 0
        %v1804 = vsel %vm1676, 1, 0
        %v1805 = vsel %vm1677, 1, 0
        %v1806 = vsel %vm1678, 1, 0
        %v1807 = vsel %vm1679, 1, 0
        %v1808 = vsel %vm1680, 1, 0
        %v1809 = vsel %vm1681, 1, 0
        %v1810 = vsel %vm1682, 1, 0
        %v1811 = vsel %vm1683, 1, 0
        %v1812 = vsel %vm1684, 1, 0
        %v1813 = vsel %vm1685, 1, 0
        %v1814 = vsel %vm1686, 1, 0
        %v1815 = vsel %vm1687, 1, 0
        %v1816 = vsel %vm1688, 1, 0
        %v1817 = vsel %vm1689, 1, 0
        %v1818 = vsel %vm1690, 1, 0
        %v1819 = vsel %vm1691, 1, 0
        %v1820 = vsel %vm1692, 1, 0
        %v1821 = vsel %vm1693, 1, 0
        %v1822 = vsel %vm1694, 1, 0
        %v1823 = vsel %vm1695, 1, 0
        %v1824 = vsel %vm1696, 1, 0
        %v1825 = vsel %vm1697, 1, 0
        %v1826 = vsel %vm1698, 1, 0
        %v1827 = vsel %vm1699, 1, 0
        %v1828 = vsel %vm1700, 1, 0
        %v1829 = vsel %vm1701, 1, 0
        %v1830 = vsel %vm1702, 1, 0
        %v1831 = vsel %vm1703, 1, 0
        %v1832 = vsel %vm1704, 1, 0
        %v1833 = vsel %vm1705, 1, 0
        %v1834 = vsel %vm1706, 1, 0
        %v1835 = vsel %vm1707, 1, 0
        %v1836 = vsel %vm1708, 1, 0
        %v1837 = vsel %vm1709, 1, 0
        %v1838 = vsel %vm1710, 1, 0
        %v1839 = vsel %vm1711, 1, 0
        %v1840 = vsel %vm1712, 1, 0
        %v1841 = vsel %vm1713, 1, 0
        %v1842 = vsel %vm1714, 1, 0
        %v1843 = vsel %vm1715, 1, 0
        %v1844 = vsel %vm1716, 1, 0
        %v1845 = vsel %vm1717, 1, 0
        %v1846 = vsel %vm1718, 1, 0
        %v1847 = vsel %vm1719, 1, 0
        %v1848 = vsel %vm1720, 1, 0
        %v1849 = vsel %vm1721, 1, 0
        %v1850 = vsel %vm1722, 1, 0
        %v1851 = vsel %vm1723, 1, 0
        %v1852 = vsel %vm1724, 1, 0
        %v1853 = vsel %vm1725, 1, 0
        %v1854 = vsel %vm1726, 1, 0
        %v1855 = vsel %vm1727, 1, 0
        %v1856 = vsel %vm1728, 1, 0
        %v1857 = vsel %vm1729, 1, 0
        %v1858 = vsel %vm1730, 1, 0
        %v1859 = vsel %vm1731, 1, 0
        %v1860 = vsel %vm1732, 1, 0
        %v1861 = vsel %vm1733, 1, 0
        %v1862 = vsel %vm1734, 1, 0
        %v1863 = vsel %vm1735, 1, 0
        %v1864 = vsel %vm1736, 1, 0
        %v1865 = vsel %vm1737, 1, 0
        %v1866 = vsel %vm1738, 1, 0
        %v1867 = vsel %vm1739, 1, 0
        %v1868 = vsel %vm1740, 1, 0
        %v1869 = vsel %vm1741, 1, 0
        %v1870 = vsel %vm1742, 1, 0
        %v1871 = vsel %vm1743, 1, 0
        %v1872 = vsel %vm1744, 1, 0
        %v1873 = vsel %vm1745, 1, 0
        %v1874 = vsel %vm1746, 1, 0
        %v1875 = vsel %vm1747, 1, 0
        %v1876 = vsel %vm1748, 1, 0
        %v1877 = vsel %vm1749, 1, 0
        %v1878 = vsel %vm1750, 1, 0
        %v1879 = vsel %vm1751, 1, 0
        %v1880 = vsel %vm1752, 1, 0
        %v1881 = vsel %vm1753, 1, 0
        %v1882 = vsel %vm1754, 1, 0
        %v1883 = vsel %vm1755, 1, 0
        %v1884 = vsel %vm1756, 1, 0
        %v1885 = vsel %vm1757, 1, 0
        %v1886 = vsel %vm1758, 1, 0
        %v1887 = vsel %vm1759, 1, 0
        %v1888 = vsel %vm1760, 1, 0
        %v1889 = vsel %vm1761, 1, 0
        %v1890 = vsel %vm1762, 1, 0
        %v1891 = vsel %vm1763, 1, 0
        %v1892 = vsel %vm1764, 1, 0
        %v1893 = vsel %vm1765, 1, 0
        %v1894 = vsel %vm1766, 1, 0
        %v1895 = vsel %vm1767, 1, 0
        %v1896 = vadd.s32 %v1320, %v1768
        %v1897 = vadd.s32 %v1321, %v1769
        %v1898 = vadd.s32 %v1322, %v1770
        %v1899 = vadd.s32 %v1323, %v1771
        %v1900 = vadd.s32 %v1324, %v1772
        %v1901 = vadd.s32 %v1325, %v1773
        %v1902 = vadd.s32 %v1326, %v1774
        %v1903 = vadd.s32 %v1327, %v1775
        %v1904 = vadd.s32 %v1328, %v1776
        %v1905 = vadd.s32 %v1329, %v1777
        %v1906 = vadd.s32 %v1330, %v1778
        %v1907 = vadd.s32 %v1331, %v1779
        %v1908 = vadd.s32 %v1332, %v1780
        %v1909 = vadd.s32 %v1333, %v1781
        %v1910 = vadd.s32 %v1334, %v1782
        %v1911 = vadd.s32 %v1335, %v1783
        %v1912 = vadd.s32 %v1336, %v1784
        %v1913 = vadd.s32 %v1337, %v1785
        %v1914 = vadd.s32 %v1338, %v1786
        %v1915 = vadd.s32 %v1339, %v1787
        %v1916 = vadd.s32 %v1340, %v1788
        %v1917 = vadd.s32 %v1341, %v1789
        %v1918 = vadd.s32 %v1342, %v1790
        %v1919 = vadd.s32 %v1343, %v1791
        %v1920 = vadd.s32 %v1344, %v1792
        %v1921 = vadd.s32 %v1345, %v1793
        %v1922 = vadd.s32 %v1346, %v1794
        %v1923 = vadd.s32 %v1347, %v1795
        %v1924 = vadd.s32 %v1348, %v1796
        %v1925 = vadd.s32 %v1349, %v1797
        %v1926 = vadd.s32 %v1350, %v1798
        %v1927 = vadd.s32 %v1351, %v1799
        %v1928 = vadd.s32 %v1352, %v1800
        %v1929 = vadd.s32 %v1353, %v1801
        %v1930 = vadd.s32 %v1354, %v1802
        %v1931 = vadd.s32 %v1355, %v1803
        %v1932 = vadd.s32 %v1356, %v1804
        %v1933 = vadd.s32 %v1357, %v1805
        %v1934 = vadd.s32 %v1358, %v1806
        %v1935 = vadd.s32 %v1359, %v1807
        %v1936 = vadd.s32 %v1360, %v1808
        %v1937 = vadd.s32 %v1361, %v1809
        %v1938 = vadd.s32 %v1362, %v1810
        %v1939 = vadd.s32 %v1363, %v1811
        %v1940 = vadd.s32 %v1364, %v1812
        %v1941 = vadd.s32 %v1365, %v1813
        %v1942 = vadd.s32 %v1366, %v1814
        %v1943 = vadd.s32 %v1367, %v1815
        %v1944 = vadd.s32 %v1368, %v1816
        %v1945 = vadd.s32 %v1369, %v1817
        %v1946 = vadd.s32 %v1370, %v1818
        %v1947 = vadd.s32 %v1371, %v1819
        %v1948 = vadd.s32 %v1372, %v1820
        %v1949 = vadd.s32 %v1373, %v1821
        %v1950 = vadd.s32 %v1374, %v1822
        %v1951 = vadd.s32 %v1375, %v1823
        %v1952 = vadd.s32 %v1376, %v1824
        %v1953 = vadd.s32 %v1377, %v1825
        %v1954 = vadd.s32 %v1378, %v1826
        %v1955 = vadd.s32 %v1379, %v1827
        %v1956 = vadd.s32 %v1380, %v1828
        %v1957 = vadd.s32 %v1381, %v1829
        %v1958 = vadd.s32 %v1382, %v1830
        %v1959 = vadd.s32 %v1383, %v1831
        %v1960 = vadd.s32 %v1384, %v1832
        %v1961 = vadd.s32 %v1385, %v1833
        %v1962 = vadd.s32 %v1386, %v1834
        %v1963 = vadd.s32 %v1387, %v1835
        %v1964 = vadd.s32 %v1388, %v1836
        %v1965 = vadd.s32 %v1389, %v1837
        %v1966 = vadd.s32 %v1390, %v1838
        %v1967 = vadd.s32 %v1391, %v1839
        %v1968 = vadd.s32 %v1392, %v1840
        %v1969 = vadd.s32 %v1393, %v1841
        %v1970 = vadd.s32 %v1394, %v1842
        %v1971 = vadd.s32 %v1395, %v1843
        %v1972 = vadd.s32 %v1396, %v1844
        %v1973 = vadd.s32 %v1397, %v1845
        %v1974 = vadd.s32 %v1398, %v1846
        %v1975 = vadd.s32 %v1399, %v1847
        %v1976 = vadd.s32 %v1400, %v1848
        %v1977 = vadd.s32 %v1401, %v1849
        %v1978 = vadd.s32 %v1402, %v1850
        %v1979 = vadd.s32 %v1403, %v1851
        %v1980 = vadd.s32 %v1404, %v1852
        %v1981 = vadd.s32 %v1405, %v1853
        %v1982 = vadd.s32 %v1406, %v1854
        %v1983 = vadd.s32 %v1407, %v1855
        %v1984 = vadd.s32 %v1408, %v1856
        %v1985 = vadd.s32 %v1409, %v1857
        %v1986 = vadd.s32 %v1410, %v1858
        %v1987 = vadd.s32 %v1411, %v1859
        %v1988 = vadd.s32 %v1412, %v1860
        %v1989 = vadd.s32 %v1413, %v1861
        %v1990 = vadd.s32 %v1414, %v1862
        %v1991 = vadd.s32 %v1415, %v1863
        %v1992 = vadd.s32 %v1416, %v1864
        %v1993 = vadd.s32 %v1417, %v1865
        %v1994 = vadd.s32 %v1418, %v1866
        %v1995 = vadd.s32 %v1419, %v1867
        %v1996 = vadd.s32 %v1420, %v1868
        %v1997 = vadd.s32 %v1421, %v1869
        %v1998 = vadd.s32 %v1422, %v1870
        %v1999 = vadd.s32 %v1423, %v1871
        %v2000 = vadd.s32 %v1424, %v1872
        %v2001 = vadd.s32 %v1425, %v1873
        %v2002 = vadd.s32 %v1426, %v1874
        %v2003 = vadd.s32 %v1427, %v1875
        %v2004 = vadd.s32 %v1428, %v1876
        %v2005 = vadd.s32 %v1429, %v1877
        %v2006 = vadd.s32 %v1430, %v1878
        %v2007 = vadd.s32 %v1431, %v1879
        %v2008 = vadd.s32 %v1432, %v1880
        %v2009 = vadd.s32 %v1433, %v1881
        %v2010 = vadd.s32 %v1434, %v1882
        %v2011 = vadd.s32 %v1435, %v1883
        %v2012 = vadd.s32 %v1436, %v1884
        %v2013 = vadd.s32 %v1437, %v1885
        %v2014 = vadd.s32 %v1438, %v1886
        %v2015 = vadd.s32 %v1439, %v1887
        %v2016 = vadd.s32 %v1440, %v1888
        %v2017 = vadd.s32 %v1441, %v1889
        %v2018 = vadd.s32 %v1442, %v1890
        %v2019 = vadd.s32 %v1443, %v1891
        %v2020 = vadd.s32 %v1444, %v1892
        %v2021 = vadd.s32 %v1445, %v1893
        %v2022 = vadd.s32 %v1446, %v1894
        %v2023 = vadd.s32 %v1447, %v1895
        %v2024 = vcvt.s32.f32 %v1896
        %v2025 = vcvt.s32.f32 %v1897
        %v2026 = vcvt.s32.f32 %v1898
        %v2027 = vcvt.s32.f32 %v1899
        %v2028 = vcvt.s32.f32 %v1900
        %v2029 = vcvt.s32.f32 %v1901
        %v2030 = vcvt.s32.f32 %v1902
        %v2031 = vcvt.s32.f32 %v1903
        %v2032 = vcvt.s32.f32 %v1904
        %v2033 = vcvt.s32.f32 %v1905
        %v2034 = vcvt.s32.f32 %v1906
        %v2035 = vcvt.s32.f32 %v1907
        %v2036 = vcvt.s32.f32 %v1908
        %v2037 = vcvt.s32.f32 %v1909
        %v2038 = vcvt.s32.f32 %v1910
        %v2039 = vcvt.s32.f32 %v1911
        %v2040 = vcvt.s32.f32 %v1912
        %v2041 = vcvt.s32.f32 %v1913
        %v2042 = vcvt.s32.f32 %v1914
        %v2043 = vcvt.s32.f32 %v1915
        %v2044 = vcvt.s32.f32 %v1916
        %v2045 = vcvt.s32.f32 %v1917
        %v2046 = vcvt.s32.f32 %v1918
        %v2047 = vcvt.s32.f32 %v1919
        %v2048 = vcvt.s32.f32 %v1920
        %v2049 = vcvt.s32.f32 %v1921
        %v2050 = vcvt.s32.f32 %v1922
        %v2051 = vcvt.s32.f32 %v1923
        %v2052 = vcvt.s32.f32 %v1924
        %v2053 = vcvt.s32.f32 %v1925
        %v2054 = vcvt.s32.f32 %v1926
        %v2055 = vcvt.s32.f32 %v1927
        %v2056 = vcvt.s32.f32 %v1928
        %v2057 = vcvt.s32.f32 %v1929
        %v2058 = vcvt.s32.f32 %v1930
        %v2059 = vcvt.s32.f32 %v1931
        %v2060 = vcvt.s32.f32 %v1932
        %v2061 = vcvt.s32.f32 %v1933
        %v2062 = vcvt.s32.f32 %v1934
        %v2063 = vcvt.s32.f32 %v1935
        %v2064 = vcvt.s32.f32 %v1936
        %v2065 = vcvt.s32.f32 %v1937
        %v2066 = vcvt.s32.f32 %v1938
        %v2067 = vcvt.s32.f32 %v1939
        %v2068 = vcvt.s32.f32 %v1940
        %v2069 = vcvt.s32.f32 %v1941
        %v2070 = vcvt.s32.f32 %v1942
        %v2071 = vcvt.s32.f32 %v1943
        %v2072 = vcvt.s32.f32 %v1944
        %v2073 = vcvt.s32.f32 %v1945
        %v2074 = vcvt.s32.f32 %v1946
        %v2075 = vcvt.s32.f32 %v1947
        %v2076 = vcvt.s32.f32 %v1948
        %v2077 = vcvt.s32.f32 %v1949
        %v2078 = vcvt.s32.f32 %v1950
        %v2079 = vcvt.s32.f32 %v1951
        %v2080 = vcvt.s32.f32 %v1952
        %v2081 = vcvt.s32.f32 %v1953
        %v2082 = vcvt.s32.f32 %v1954
        %v2083 = vcvt.s32.f32 %v1955
        %v2084 = vcvt.s32.f32 %v1956
        %v2085 = vcvt.s32.f32 %v1957
        %v2086 = vcvt.s32.f32 %v1958
        %v2087 = vcvt.s32.f32 %v1959
        %v2088 = vcvt.s32.f32 %v1960
        %v2089 = vcvt.s32.f32 %v1961
        %v2090 = vcvt.s32.f32 %v1962
        %v2091 = vcvt.s32.f32 %v1963
        %v2092 = vcvt.s32.f32 %v1964
        %v2093 = vcvt.s32.f32 %v1965
        %v2094 = vcvt.s32.f32 %v1966
        %v2095 = vcvt.s32.f32 %v1967
        %v2096 = vcvt.s32.f32 %v1968
        %v2097 = vcvt.s32.f32 %v1969
        %v2098 = vcvt.s32.f32 %v1970
        %v2099 = vcvt.s32.f32 %v1971
        %v2100 = vcvt.s32.f32 %v1972
        %v2101 = vcvt.s32.f32 %v1973
        %v2102 = vcvt.s32.f32 %v1974
        %v2103 = vcvt.s32.f32 %v1975
        %v2104 = vcvt.s32.f32 %v1976
        %v2105 = vcvt.s32.f32 %v1977
        %v2106 = vcvt.s32.f32 %v1978
        %v2107 = vcvt.s32.f32 %v1979
        %v2108 = vcvt.s32.f32 %v1980
        %v2109 = vcvt.s32.f32 %v1981
        %v2110 = vcvt.s32.f32 %v1982
        %v2111 = vcvt.s32.f32 %v1983
        %v2112 = vcvt.s32.f32 %v1984
        %v2113 = vcvt.s32.f32 %v1985
        %v2114 = vcvt.s32.f32 %v1986
        %v2115 = vcvt.s32.f32 %v1987
        %v2116 = vcvt.s32.f32 %v1988
        %v2117 = vcvt.s32.f32 %v1989
        %v2118 = vcvt.s32.f32 %v1990
        %v2119 = vcvt.s32.f32 %v1991
        %v2120 = vcvt.s32.f32 %v1992
        %v2121 = vcvt.s32.f32 %v1993
        %v2122 = vcvt.s32.f32 %v1994
        %v2123 = vcvt.s32.f32 %v1995
        %v2124 = vcvt.s32.f32 %v1996
        %v2125 = vcvt.s32.f32 %v1997
        %v2126 = vcvt.s32.f32 %v1998
        %v2127 = vcvt.s32.f32 %v1999
        %v2128 = vcvt.s32.f32 %v2000
        %v2129 = vcvt.s32.f32 %v2001
        %v2130 = vcvt.s32.f32 %v2002
        %v2131 = vcvt.s32.f32 %v2003
        %v2132 = vcvt.s32.f32 %v2004
        %v2133 = vcvt.s32.f32 %v2005
        %v2134 = vcvt.s32.f32 %v2006
        %v2135 = vcvt.s32.f32 %v2007
        %v2136 = vcvt.s32.f32 %v2008
        %v2137 = vcvt.s32.f32 %v2009
        %v2138 = vcvt.s32.f32 %v2010
        %v2139 = vcvt.s32.f32 %v2011
        %v2140 = vcvt.s32.f32 %v2012
        %v2141 = vcvt.s32.f32 %v2013
        %v2142 = vcvt.s32.f32 %v2014
        %v2143 = vcvt.s32.f32 %v2015
        %v2144 = vcvt.s32.f32 %v2016
        %v2145 = vcvt.s32.f32 %v2017
        %v2146 = vcvt.s32.f32 %v2018
        %v2147 = vcvt.s32.f32 %v2019
        %v2148 = vcvt.s32.f32 %v2020
        %v2149 = vcvt.s32.f32 %v2021
        %v2150 = vcvt.s32.f32 %v2022
        %v2151 = vcvt.s32.f32 %v2023
        %v2152 = vpack.c.bf16 %v2026, %v2024
        %v2153 = vpack.c.bf16 %v2027, %v2025
        %v2154 = vpack.c.bf16 %v2030, %v2028
        %v2155 = vpack.c.bf16 %v2031, %v2029
        %v2156 = vpack.c.bf16 %v2034, %v2032
        %v2157 = vpack.c.bf16 %v2035, %v2033
        %v2158 = vpack.c.bf16 %v2038, %v2036
        %v2159 = vpack.c.bf16 %v2039, %v2037
        %v2160 = vpack.c.bf16 %v2042, %v2040
        %v2161 = vpack.c.bf16 %v2043, %v2041
        %v2162 = vpack.c.bf16 %v2046, %v2044
        %v2163 = vpack.c.bf16 %v2047, %v2045
        %v2164 = vpack.c.bf16 %v2050, %v2048
        %v2165 = vpack.c.bf16 %v2051, %v2049
        %v2166 = vpack.c.bf16 %v2054, %v2052
        %v2167 = vpack.c.bf16 %v2055, %v2053
        %v2168 = vpack.c.bf16 %v2058, %v2056
        %v2169 = vpack.c.bf16 %v2059, %v2057
        %v2170 = vpack.c.bf16 %v2062, %v2060
        %v2171 = vpack.c.bf16 %v2063, %v2061
        %v2172 = vpack.c.bf16 %v2066, %v2064
        %v2173 = vpack.c.bf16 %v2067, %v2065
        %v2174 = vpack.c.bf16 %v2070, %v2068
        %v2175 = vpack.c.bf16 %v2071, %v2069
        %v2176 = vpack.c.bf16 %v2074, %v2072
        %v2177 = vpack.c.bf16 %v2075, %v2073
        %v2178 = vpack.c.bf16 %v2078, %v2076
        %v2179 = vpack.c.bf16 %v2079, %v2077
        %v2180 = vpack.c.bf16 %v2082, %v2080
        %v2181 = vpack.c.bf16 %v2083, %v2081
        %v2182 = vpack.c.bf16 %v2086, %v2084
        %v2183 = vpack.c.bf16 %v2087, %v2085
        %v2184 = vpack.c.bf16 %v2090, %v2088
        %v2185 = vpack.c.bf16 %v2091, %v2089
        %v2186 = vpack.c.bf16 %v2094, %v2092
        %v2187 = vpack.c.bf16 %v2095, %v2093
        %v2188 = vpack.c.bf16 %v2098, %v2096
        %v2189 = vpack.c.bf16 %v2099, %v2097
        %v2190 = vpack.c.bf16 %v2102, %v2100
        %v2191 = vpack.c.bf16 %v2103, %v2101
        %v2192 = vpack.c.bf16 %v2106, %v2104
        %v2193 = vpack.c.bf16 %v2107, %v2105
        %v2194 = vpack.c.bf16 %v2110, %v2108
        %v2195 = vpack.c.bf16 %v2111, %v2109
        %v2196 = vpack.c.bf16 %v2114, %v2112
        %v2197 = vpack.c.bf16 %v2115, %v2113
        %v2198 = vpack.c.bf16 %v2118, %v2116
        %v2199 = vpack.c.bf16 %v2119, %v2117
        %v2200 = vpack.c.bf16 %v2122, %v2120
        %v2201 = vpack.c.bf16 %v2123, %v2121
        %v2202 = vpack.c.bf16 %v2126, %v2124
        %v2203 = vpack.c.bf16 %v2127, %v2125
        %v2204 = vpack.c.bf16 %v2130, %v2128
        %v2205 = vpack.c.bf16 %v2131, %v2129
        %v2206 = vpack.c.bf16 %v2134, %v2132
        %v2207 = vpack.c.bf16 %v2135, %v2133
        %v2208 = vpack.c.bf16 %v2138, %v2136
        %v2209 = vpack.c.bf16 %v2139, %v2137
        %v2210 = vpack.c.bf16 %v2142, %v2140
        %v2211 = vpack.c.bf16 %v2143, %v2141
        %v2212 = vpack.c.bf16 %v2146, %v2144
        %v2213 = vpack.c.bf16 %v2147, %v2145
        %v2214 = vpack.c.bf16 %v2150, %v2148
        %v2215 = vpack.c.bf16 %v2151, %v2149
        %v2216 = vld [vmem:[%s270] sm:$0xff]
        %2218 = vst [vmem:[#allocation1] ss:$4 sm:$0xff] %v2216
        %v2219 = vld.sshfl [vmem:[#allocation1] sm:$0xff pattern:$0x73625140]
        %v2220 = vld.sshfl [vmem:[#allocation1 + $0x8] sm:$0xff pattern:$0x73625140]
        %v2221 = vld.sshfl [vmem:[#allocation1 + $0x10] sm:$0xff pattern:$0x73625140]
        %v2222 = vld.sshfl [vmem:[#allocation1 + $0x18] sm:$0xff pattern:$0x73625140]
        %2227 = vmatpush.bf16.msra.mxu0 %v2166
        %2228 = vmatpush.bf16.msra.mxu0 %v2164
        %2229 = vmatpush.bf16.msra.mxu0 %v2162
        %2230 = vmatpush.bf16.msra.mxu0 %v2160
        %2231 = vmatpush.bf16.msra.mxu0 %v2158
        %2232 = vmatpush.bf16.msra.mxu0 %v2156
        %2233 = vmatpush.bf16.msra.mxu0 %v2154
        %2234 = vmatpush.bf16.msra.mxu0 %v2152
        %2235 = vmatmul.bf16.gmra.mxu0 %v2219
        %v2236 = vpop.f32.mrf.mxu0
        %v2237 = vadd.f32 0.0, %v2236
        %v2238 = vpop.f32.mrf.mxu0
        %2239 = vdwg.mxu0
        %2240 = vmatpush.bf16.msra.mxu0 %v2182
        %2241 = vmatpush.bf16.msra.mxu0 %v2180
        %2242 = vmatpush.bf16.msra.mxu0 %v2178
        %2243 = vmatpush.bf16.msra.mxu0 %v2176
        %2244 = vmatpush.bf16.msra.mxu0 %v2174
        %2245 = vmatpush.bf16.msra.mxu0 %v2172
        %2246 = vmatpush.bf16.msra.mxu0 %v2170
        %2247 = vmatpush.bf16.msra.mxu0 %v2168
        %2248 = vmatmul.bf16.gmra.mxu0 %v2220
        %v2249 = vpop.f32.mrf.mxu0
        %v2250 = vadd.f32 %v2237, %v2249
        %v2251 = vpop.f32.mrf.mxu0
        %2252 = vdwg.mxu0
        %2253 = vmatpush.bf16.msra.mxu0 %v2198
        %2254 = vmatpush.bf16.msra.mxu0 %v2196
        %2255 = vmatpush.bf16.msra.mxu0 %v2194
        %2256 = vmatpush.bf16.msra.mxu0 %v2192
        %2257 = vmatpush.bf16.msra.mxu0 %v2190
        %2258 = vmatpush.bf16.msra.mxu0 %v2188
        %2259 = vmatpush.bf16.msra.mxu0 %v2186
        %2260 = vmatpush.bf16.msra.mxu0 %v2184
        %2261 = vmatmul.bf16.gmra.mxu0 %v2221
        %v2262 = vpop.f32.mrf.mxu0
        %v2263 = vadd.f32 %v2250, %v2262
        %v2264 = vpop.f32.mrf.mxu0
        %2265 = vdwg.mxu0
        %2266 = vmatpush.bf16.msra.mxu0 %v2214
        %2267 = vmatpush.bf16.msra.mxu0 %v2212
        %2268 = vmatpush.bf16.msra.mxu0 %v2210
        %2269 = vmatpush.bf16.msra.mxu0 %v2208
        %2270 = vmatpush.bf16.msra.mxu0 %v2206
        %2271 = vmatpush.bf16.msra.mxu0 %v2204
        %2272 = vmatpush.bf16.msra.mxu0 %v2202
        %2273 = vmatpush.bf16.msra.mxu0 %v2200
        %2274 = vmatmul.bf16.gmra.mxu0 %v2222
        %v2275 = vpop.f32.mrf.mxu0
        %v2276 = vadd.f32 %v2263, %v2275
        %v2277 = vpop.f32.mrf.mxu0
        %2278 = vdwg.mxu0
        %2279 = vmatpush.bf16.msra.mxu0 %v2167
        %2280 = vmatpush.bf16.msra.mxu0 %v2165
        %2281 = vmatpush.bf16.msra.mxu0 %v2163
        %2282 = vmatpush.bf16.msra.mxu0 %v2161
        %2283 = vmatpush.bf16.msra.mxu0 %v2159
        %2284 = vmatpush.bf16.msra.mxu0 %v2157
        %2285 = vmatpush.bf16.msra.mxu0 %v2155
        %2286 = vmatpush.bf16.msra.mxu0 %v2153
        %2287 = vmatmul.bf16.gmra.mxu0 %v2219
        %v2288 = vpop.f32.mrf.mxu0
        %v2289 = vadd.f32 0.0, %v2288
        %v2290 = vpop.f32.mrf.mxu0
        %2291 = vdwg.mxu0
        %2292 = vmatpush.bf16.msra.mxu0 %v2183
        %2293 = vmatpush.bf16.msra.mxu0 %v2181
        %2294 = vmatpush.bf16.msra.mxu0 %v2179
        %2295 = vmatpush.bf16.msra.mxu0 %v2177
        %2296 = vmatpush.bf16.msra.mxu0 %v2175
        %2297 = vmatpush.bf16.msra.mxu0 %v2173
        %2298 = vmatpush.bf16.msra.mxu0 %v2171
        %2299 = vmatpush.bf16.msra.mxu0 %v2169
        %2300 = vmatmul.bf16.gmra.mxu0 %v2220
        %v2301 = vpop.f32.mrf.mxu0
        %v2302 = vadd.f32 %v2289, %v2301
        %v2303 = vpop.f32.mrf.mxu0
        %2304 = vdwg.mxu0
        %2305 = vmatpush.bf16.msra.mxu0 %v2199
        %2306 = vmatpush.bf16.msra.mxu0 %v2197
        %2307 = vmatpush.bf16.msra.mxu0 %v2195
        %2308 = vmatpush.bf16.msra.mxu0 %v2193
        %2309 = vmatpush.bf16.msra.mxu0 %v2191
        %2310 = vmatpush.bf16.msra.mxu0 %v2189
        %2311 = vmatpush.bf16.msra.mxu0 %v2187
        %2312 = vmatpush.bf16.msra.mxu0 %v2185
        %2313 = vmatmul.bf16.gmra.mxu0 %v2221
        %v2314 = vpop.f32.mrf.mxu0
        %v2315 = vadd.f32 %v2302, %v2314
        %v2316 = vpop.f32.mrf.mxu0
        %2317 = vdwg.mxu0
        %2318 = vmatpush.bf16.msra.mxu0 %v2215
        %2319 = vmatpush.bf16.msra.mxu0 %v2213
        %2320 = vmatpush.bf16.msra.mxu0 %v2211
        %2321 = vmatpush.bf16.msra.mxu0 %v2209
        %2322 = vmatpush.bf16.msra.mxu0 %v2207
        %2323 = vmatpush.bf16.msra.mxu0 %v2205
        %2324 = vmatpush.bf16.msra.mxu0 %v2203
        %2325 = vmatpush.bf16.msra.mxu0 %v2201
        %2326 = vmatmul.bf16.gmra.mxu0 %v2222
        %v2327 = vpop.f32.mrf.mxu0
        %v2328 = vadd.f32 %v2315, %v2327
        %v2329 = vpop.f32.mrf.mxu0
        %2330 = vdwg.mxu0
        %v2331 = vld [vmem:[%s279] sm:$0x77]
        %s2332 = sld [smem:[#allocation2 + %s20]]
        %v2333 = vstv %s2332
        %v2334 = vmul.f32 %v2333, %v2276
        %v2335 = vmul.f32 %v2333, %v2328
        %v2338 = vrot.slane %v2335, 4
        %vm2339 = vcmask 1043456
        %v2340 = vsel %vm2339, %v2334, %v2338
        %v2342 = vadd.f32 %v2331, %v2340
        %2343 = vst [vmem:[%s289] sm:$0x77] %v2342
        %s2344 = smul.u32 2, %s21
        %p2345 = scmp.lt.s32.totalorder %s20, 1
        %s2346 = scalar_select %p2345, %s20, 1
        %p2347 = scmp.lt.s32.totalorder %s2344, 1
        %s2348 = scalar_select %p2347, %s2344, 1
        %s2349 = smul.addr %s2346, 2
        %s2350 = sadd.s32 %s2348, %s2349
        %s2351 = smul.addr %s2350, 4
        %s2352 = scalar_lea.vmem %s4, %s2351
        // Predicated region
        $region41: #{tpu_custom_call.1} parent=35 // pred_check
          %p2353 = pneg %p149
        $region42: #{tpu_custom_call.1} parent=35 // pred_check_branch
          %2355 = sbr.rel (%p2353) target = $region44
        $region43: #{tpu_custom_call.1} parent=35 // pred_region
          %s2356 = smul.u32 2, %s21
        $region44: #{tpu_custom_call.1} parent=35 // pred_fallthru
          _
      $region36: #{tpu_custom_call.1} parent=5 // pred_fallthru
        _
      %p2357 = scmp.le.s32.totalorder 2, %s11
      // Predicated region
      $region45: #{tpu_custom_call.1} parent=5 // pred_check
        %p2358 = pneg %p2357
      $region46: #{tpu_custom_call.1} parent=5 // pred_check_branch
        %2360 = sbr.rel (%p2358) target = $region48
      $region47: #{tpu_custom_call.1} parent=5 // pred_region
        %s2361 = ssub.s32 %s11, 2
        // Predicated region
        $region49: #{tpu_custom_call.1} parent=47 // pred_check
          %p2362 = pneg %p155
        $region50: #{tpu_custom_call.1} parent=47 // pred_check_branch
          %2364 = sbr.rel (%p2362) target = $region52
        $region51: #{tpu_custom_call.1} parent=47 // pred_region
          %s2365 = smul.u32 2, %s23
          %p2366 = scmp.lt.s32.totalorder %s22, 1
          %s2367 = scalar_select %p2366, %s22, 1
          %p2368 = scmp.lt.s32.totalorder %s2365, 1
          %s2369 = scalar_select %p2368, %s2365, 1
          %s2370 = smul.addr %s2367, 2
          %s2371 = sadd.s32 %s2369, %s2370
          %s2372 = smul.addr %s2371, 4
          %s2373 = scalar_lea.vmem %s4, %s2372
        $region52: #{tpu_custom_call.1} parent=47 // pred_fallthru
          _
      $region48: #{tpu_custom_call.1} parent=5 // pred_fallthru
        _
    $region6: #{tpu_custom_call.1} parent=1 // loop_footer
      %s15 = sadd.s32 1, %s11
    $region7: #{tpu_custom_call.1} parent=1 // loop_footer_branch
      %10 = sbr.rel target = $region3
    $region8: #{tpu_custom_call.1} parent=1 // loop_exit
      _
    %2374 = vsyncpa [#allocation3], 1
    %s2375 = scalar_lea.sflag [#allocation3], 1
    %2376 = vsyncpa %s2375, 1

</llo_original>
